<compile_context>
chip_gen: v6e
topology: v6e:2x2x1
jax: 0.10.0
libtpu: 0.0.40
codegen_flags: <defaults>
</compile_context>

<pallas_src>
import numpy as np
import jax
import jax.numpy as jnp
from jax import lax
from jax.experimental import pallas as pl
from jax.experimental.pallas import tpu as pltpu


# ----------------------------------------------------------------------------
# Single fused Pallas kernel: conv1+ReLU -> conv2+ReLU -> merged FC heads
# ----------------------------------------------------------------------------
def _vae_encode_kernel(x_ref, w1_ref, b1_ref, w2_ref, b2_ref,
                       wfc_ref, bfc_ref, o_ref):
    f32 = jnp.float32
    # conv1 (folded into a dense matrix) + bias + ReLU   [tb,1024] x [1024,512]
    h = jnp.dot(x_ref[...], w1_ref[...], preferred_element_type=f32)
    h = jnp.maximum(h + b1_ref[...], 0.0)
    # conv2 (folded into a dense matrix) + bias + ReLU   [tb,512]  x [512,256]
    h = jnp.dot(h, w2_ref[...], preferred_element_type=f32)
    h = jnp.maximum(h + b2_ref[...], 0.0)
    # merged FC heads (mu | logvar | zero-pad to 128)    [tb,256]  x [256,128]
    out = jnp.dot(h, wfc_ref[...], preferred_element_type=f32) + bfc_ref[...]
    o_ref[...] = out.astype(o_ref.dtype)


def _full_spec(arr):
    nd = arr.ndim
    return pl.BlockSpec(arr.shape, lambda i, _nd=nd: (0,) * _nd)


def _batch_tile(b):
    if b <= 8:
        return b                    # block == full dim satisfies the (8,128) rule
    for t in (512, 256, 128, 64, 32, 16, 8):
        if b % t == 0:
            return t                # multiple-of-8 batch tile
    return b                        # ragged batch: single full-batch tile


def _encoder_call(x2d, kp):
    b, kx = x2d.shape
    w1, b1, w2, b2, wfc, bfc = (kp["w1"], kp["b1"], kp["w2"], kp["b2"],
                                kp["wfc"], kp["bfc"])
    n1, n2, n_out = w1.shape[1], w2.shape[1], wfc.shape[1]
    tb = _batch_tile(b)
    grid = (b // tb,)

    flops = 2 * b * (kx * n1 + n1 * n2 + n2 * n_out)
    bytes_accessed = 4 * (b * kx + w1.size + b1.size + w2.size + b2.size
                          + wfc.size + bfc.size + b * n_out)

    operands = (x2d, w1, b1, w2, b2, wfc, bfc)
    in_specs = [pl.BlockSpec((tb, kx), lambda i: (i, 0))]
    in_specs += [_full_spec(a) for a in operands[1:]]

    return pl.pallas_call(
        _vae_encode_kernel,
        out_shape=jax.ShapeDtypeStruct((b, n_out), jnp.float32),
        grid=grid,
        in_specs=in_specs,
        out_specs=pl.BlockSpec((tb, n_out), lambda i: (i, 0)),
        compiler_params=pltpu.CompilerParams(
            # independent batch tiles -> megacore-shardable on v7x
            dimension_semantics=("parallel",),
            # explicit budget, well under v7x's 64 MiB physical VMEM
            vmem_limit_bytes=32 * 1024 * 1024),
        cost_estimate=pl.CostEstimate(flops=flops, transcendentals=0,
                                      bytes_accessed=bytes_accessed),
    )(*operands)


def encode(kparams, x_nchw, latent=32):
    """ProfileModule.forward(x) == wrapped_module.encode(x) -> (mu, logvar)."""
    b = x_nchw.shape[0]
    x2d = x_nchw.astype(jnp.float32).reshape(b, -1)     # free NCHW flatten
    out = _encoder_call(x2d, kparams)                   # [B,128] = mu|logvar|0
    return out[:, :latent], out[:, latent:2 * latent]


# ----------------------------------------------------------------------------
# Parameters: deterministic torch-layout init + ONE-TIME kernel-ready prep
# ----------------------------------------------------------------------------
def init_params(key, cin=4, c1=8, c2=16, latent=32, h=16, w=16):
    ks = jax.random.split(key, 8)
    flat = c2 * (h // 4) * (w // 4)
    s = 0.05
    return {
        "conv1_w": s * jax.random.normal(ks[0], (c1, cin, 3, 3), jnp.float32),
        "conv1_b": s * jax.random.normal(ks[1], (c1,), jnp.float32),
        "conv2_w": s * jax.random.normal(ks[2], (c2, c1, 3, 3), jnp.float32),
        "conv2_b": s * jax.random.normal(ks[3], (c2,), jnp.float32),
        "fc_mu_w": s * jax.random.normal(ks[4], (latent, flat), jnp.float32),
        "fc_mu_b": s * jax.random.normal(ks[5], (latent,), jnp.float32),
        "fc_lv_w": s * jax.random.normal(ks[6], (latent, flat), jnp.float32),
        "fc_lv_b": s * jax.random.normal(ks[7], (latent,), jnp.float32),
    }


def _dense_conv_matrix(w_oihw, h_in, w_in, stride=2, pad=1):
    """Fold a strided conv into a dense [Cin*H*W, Cout*Hout*Wout] matrix
    (NCHW flatten on both sides). Host-side, one-time, batch-independent."""
    w_np = np.asarray(jax.device_get(w_oihw), np.float32)
    cout, cin, kh, kw = w_np.shape
    h_out = (h_in + 2 * pad - kh) // stride + 1
    w_out = (w_in + 2 * pad - kw) // stride + 1
    m = np.zeros((cin * h_in * w_in, cout * h_out * w_out), np.float32)
    for co in range(cout):
        for ci in range(cin):
            for di in range(kh):
                for dj in range(kw):
                    v = w_np[co, ci, di, dj]
                    for oh in range(h_out):
                        ih = oh * stride + di - pad
                        if not (0 <= ih < h_in):
                            continue
                        for ow in range(w_out):
                            iw = ow * stride + dj - pad
                            if not (0 <= iw < w_in):
                                continue
                            row = (ci * h_in + ih) * w_in + iw
                            col = (co * h_out + oh) * w_out + ow
                            m[row, col] += v
    return m


def prepare_params(params, h=16, w=16, dtype=jnp.float32):
    """One-time conversion of torch-layout params into kernel-ready slabs.
    Batch-independent.  dtype=jnp.bfloat16 recommended for v6e/v7x production
    (f32 kept here for the 1e-4 self-test)."""
    c2 = params["conv2_w"].shape[0]
    h1s, w1s = h // 2, w // 2
    h2s, w2s = h // 4, w // 4
    latent = params["fc_mu_b"].shape[0]
    flat = c2 * h2s * w2s

    w1 = _dense_conv_matrix(params["conv1_w"], h, w)        # [1024, 512]
    b1 = np.repeat(np.asarray(jax.device_get(params["conv1_b"])), h1s * w1s)
    w2 = _dense_conv_matrix(params["conv2_w"], h1s, w1s)    # [512, 256]
    b2 = np.repeat(np.asarray(jax.device_get(params["conv2_b"])), h2s * w2s)

    # merged FC heads, zero-padded to 128 lanes for unmasked output stores
    n_out = 128
    wfc = np.zeros((flat, n_out), np.float32)
    wfc[:, :latent] = np.asarray(jax.device_get(params["fc_mu_w"])).T
    wfc[:, latent:2 * latent] = np.asarray(jax.device_get(params["fc_lv_w"])).T
    bfc = np.zeros((n_out,), np.float32)
    bfc[:latent] = np.asarray(jax.device_get(params["fc_mu_b"]))
    bfc[latent:2 * latent] = np.asarray(jax.device_get(params["fc_lv_b"]))

    return {
        "w1": jnp.asarray(w1, dtype), "b1": jnp.asarray(b1, jnp.float32).reshape(1, -1),
        "w2": jnp.asarray(w2, dtype), "b2": jnp.asarray(b2, jnp.float32).reshape(1, -1),
        "wfc": jnp.asarray(wfc, dtype), "bfc": jnp.asarray(bfc, jnp.float32).reshape(1, -1),
    }


# ----------------------------------------------------------------------------
# Pure-JAX reference (correctness check only)
# ----------------------------------------------------------------------------
def _reference_encode(params, x):
    hi = lax.Precision.HIGHEST
    h = lax.conv_general_dilated(x, params["conv1_w"], (2, 2), ((1, 1), (1, 1)),
                                 dimension_numbers=("NCHW", "OIHW", "NCHW"),
                                 precision=hi)
    h = jax.nn.relu(h + params["conv1_b"][None, :, None, None])
    h = lax.conv_general_dilated(h, params["conv2_w"], (2, 2), ((1, 1), (1, 1)),
                                 dimension_numbers=("NCHW", "OIHW", "NCHW"),
                                 precision=hi)
    h = jax.nn.relu(h + params["conv2_b"][None, :, None, None])
    flat = h.reshape(x.shape[0], -1)
    mu = jnp.matmul(flat, params["fc_mu_w"].T, precision=hi) + params["fc_mu_b"]
    lv = jnp.matmul(flat, params["fc_lv_w"].T, precision=hi) + params["fc_lv_b"]
    return mu, lv


if __name__ == "__main__":
    key = jax.random.PRNGKey(0)
    k_param, k_x = jax.random.split(key)

    B, C, H, W = 2, 4, 16, 16
    params = init_params(k_param, cin=C, h=H, w=W)
    kparams = prepare_params(params, h=H, w=W)          # one-time, batch-independent
    x = jax.random.normal(k_x, (B, C, H, W), jnp.float32)   # NCHW input

    enc = jax.jit(encode)
    mu, logvar = enc(kparams, x)
    jax.block_until_ready((mu, logvar))

    assert mu.shape == (B, 32) and logvar.shape == (B, 32)
    assert mu.dtype == jnp.float32 and logvar.dtype == jnp.float32

    mu_ref, lv_ref = _reference_encode(params, x)
    assert jnp.allclose(mu, mu_ref, atol=1e-4, rtol=1e-4), \
        float(jnp.max(jnp.abs(mu - mu_ref)))
    assert jnp.allclose(logvar, lv_ref, atol=1e-4, rtol=1e-4), \
        float(jnp.max(jnp.abs(logvar - lv_ref)))
    print("KERNEL_OK")
</pallas_src>

<mosaic_0001>
module attributes {stable_mosaic.version = 11 : i64} {
  func.func @_vae_encode_kernel(%arg0: i32, %arg1: memref<2x1024xf32, #tpu.memory_space<vmem>>, %arg2: memref<1024x512xf32, #tpu.memory_space<vmem>>, %arg3: memref<1x512xf32, #tpu.memory_space<vmem>>, %arg4: memref<512x256xf32, #tpu.memory_space<vmem>>, %arg5: memref<1x256xf32, #tpu.memory_space<vmem>>, %arg6: memref<256x128xf32, #tpu.memory_space<vmem>>, %arg7: memref<1x128xf32, #tpu.memory_space<vmem>>, %arg8: memref<2x128xf32, #tpu.memory_space<vmem>>) attributes {dimension_semantics = [#tpu.dimension_semantics<parallel>], iteration_bounds = array<i64: 1>, scalar_prefetch = 0 : i64, scratch_operands = 0 : i64, tpu.core_type = #tpu.core_type<tc>, window_params = [{transform_indices = @transform_0, window_bounds = array<i64: 2, 1024>}, {pipeline_mode = #tpu.pipeline_mode<synchronous>, transform_indices = @transform_1, window_bounds = array<i64: 1024, 512>}, {pipeline_mode = #tpu.pipeline_mode<synchronous>, transform_indices = @transform_2, window_bounds = array<i64: 1, 512>}, {pipeline_mode = #tpu.pipeline_mode<synchronous>, transform_indices = @transform_3, window_bounds = array<i64: 512, 256>}, {pipeline_mode = #tpu.pipeline_mode<synchronous>, transform_indices = @transform_4, window_bounds = array<i64: 1, 256>}, {pipeline_mode = #tpu.pipeline_mode<synchronous>, transform_indices = @transform_5, window_bounds = array<i64: 256, 128>}, {pipeline_mode = #tpu.pipeline_mode<synchronous>, transform_indices = @transform_6, window_bounds = array<i64: 1, 128>}, {transform_indices = @transform_7, window_bounds = array<i64: 2, 128>}]} {
    %c0 = arith.constant 0 : index
    %c0_0 = arith.constant 0 : index
    %0 = vector.load %arg1[%c0, %c0_0] : memref<2x1024xf32, #tpu.memory_space<vmem>>, vector<2x1024xf32>
    %c0_1 = arith.constant 0 : index
    %c0_2 = arith.constant 0 : index
    %1 = vector.load %arg2[%c0_1, %c0_2] : memref<1024x512xf32, #tpu.memory_space<vmem>>, vector<1024x512xf32>
    %cst = arith.constant dense<0.000000e+00> : vector<2x512xf32>
    %2 = tpu.matmul %0, %1, %cst {dimension_numbers = #tpu.dot_dimension_numbers<[1], [0], [0], [1], [0, 0, 1, 1], [], []>} : vector<2x1024xf32>, vector<1024x512xf32>, vector<2x512xf32> -> vector<2x512xf32>
    %c0_3 = arith.constant 0 : index
    %c0_4 = arith.constant 0 : index
    %3 = vector.load %arg3[%c0_3, %c0_4] : memref<1x512xf32, #tpu.memory_space<vmem>>, vector<1x512xf32>
    %4 = vector.broadcast %3 : vector<1x512xf32> to vector<2x512xf32>
    %5 = arith.addf %2, %4 : vector<2x512xf32>
    %cst_5 = arith.constant 0.000000e+00 : f32
    %6 = vector.broadcast %cst_5 : f32 to vector<2x512xf32>
    %7 = arith.maximumf %5, %6 : vector<2x512xf32>
    %c0_6 = arith.constant 0 : index
    %c0_7 = arith.constant 0 : index
    %8 = vector.load %arg4[%c0_6, %c0_7] : memref<512x256xf32, #tpu.memory_space<vmem>>, vector<512x256xf32>
    %cst_8 = arith.constant dense<0.000000e+00> : vector<2x256xf32>
    %9 = tpu.matmul %7, %8, %cst_8 {dimension_numbers = #tpu.dot_dimension_numbers<[1], [0], [0], [1], [0, 0, 1, 1], [], []>} : vector<2x512xf32>, vector<512x256xf32>, vector<2x256xf32> -> vector<2x256xf32>
    %c0_9 = arith.constant 0 : index
    %c0_10 = arith.constant 0 : index
    %10 = vector.load %arg5[%c0_9, %c0_10] : memref<1x256xf32, #tpu.memory_space<vmem>>, vector<1x256xf32>
    %11 = vector.broadcast %10 : vector<1x256xf32> to vector<2x256xf32>
    %12 = arith.addf %9, %11 : vector<2x256xf32>
    %cst_11 = arith.constant 0.000000e+00 : f32
    %13 = vector.broadcast %cst_11 : f32 to vector<2x256xf32>
    %14 = arith.maximumf %12, %13 : vector<2x256xf32>
    %c0_12 = arith.constant 0 : index
    %c0_13 = arith.constant 0 : index
    %15 = vector.load %arg6[%c0_12, %c0_13] : memref<256x128xf32, #tpu.memory_space<vmem>>, vector<256x128xf32>
    %cst_14 = arith.constant dense<0.000000e+00> : vector<2x128xf32>
    %16 = tpu.matmul %14, %15, %cst_14 {dimension_numbers = #tpu.dot_dimension_numbers<[1], [0], [0], [1], [0, 0, 1, 1], [], []>} : vector<2x256xf32>, vector<256x128xf32>, vector<2x128xf32> -> vector<2x128xf32>
    %c0_15 = arith.constant 0 : index
    %c0_16 = arith.constant 0 : index
    %17 = vector.load %arg7[%c0_15, %c0_16] : memref<1x128xf32, #tpu.memory_space<vmem>>, vector<1x128xf32>
    %18 = vector.broadcast %17 : vector<1x128xf32> to vector<2x128xf32>
    %19 = arith.addf %16, %18 : vector<2x128xf32>
    %c0_17 = arith.constant 0 : index
    %c0_18 = arith.constant 0 : index
    %20 = vector.load %arg8[%c0_17, %c0_18] : memref<2x128xf32, #tpu.memory_space<vmem>>, vector<2x128xf32>
    tpu.vector_store %arg8[%c0_17, %c0_18], %19 {strides = array<i32>} : memref<2x128xf32, #tpu.memory_space<vmem>>, vector<2x128xf32>,
    return
  }
  func.func @transform_0(%arg0: i32) -> (i32, i32) {
    %c0_i32 = arith.constant 0 : i32
    %c0_i32_0 = arith.constant 0 : i32
    return %arg0, %c0_i32 : i32, i32
  }
  func.func @transform_1(%arg0: i32) -> (i32, i32) {
    %c0_i32 = arith.constant 0 : i32
    %c0_i32_0 = arith.constant 0 : i32
    %c0_i32_1 = arith.constant 0 : i32
    return %c0_i32, %c0_i32_0 : i32, i32
  }
  func.func @transform_2(%arg0: i32) -> (i32, i32) {
    %c0_i32 = arith.constant 0 : i32
    %c0_i32_0 = arith.constant 0 : i32
    %c0_i32_1 = arith.constant 0 : i32
    return %c0_i32, %c0_i32_0 : i32, i32
  }
  func.func @transform_3(%arg0: i32) -> (i32, i32) {
    %c0_i32 = arith.constant 0 : i32
    %c0_i32_0 = arith.constant 0 : i32
    %c0_i32_1 = arith.constant 0 : i32
    return %c0_i32, %c0_i32_0 : i32, i32
  }
  func.func @transform_4(%arg0: i32) -> (i32, i32) {
    %c0_i32 = arith.constant 0 : i32
    %c0_i32_0 = arith.constant 0 : i32
    %c0_i32_1 = arith.constant 0 : i32
    return %c0_i32, %c0_i32_0 : i32, i32
  }
  func.func @transform_5(%arg0: i32) -> (i32, i32) {
    %c0_i32 = arith.constant 0 : i32
    %c0_i32_0 = arith.constant 0 : i32
    %c0_i32_1 = arith.constant 0 : i32
    return %c0_i32, %c0_i32_0 : i32, i32
  }
  func.func @transform_6(%arg0: i32) -> (i32, i32) {
    %c0_i32 = arith.constant 0 : i32
    %c0_i32_0 = arith.constant 0 : i32
    %c0_i32_1 = arith.constant 0 : i32
    return %c0_i32, %c0_i32_0 : i32, i32
  }
  func.func @transform_7(%arg0: i32) -> (i32, i32) {
    %c0_i32 = arith.constant 0 : i32
    %c0_i32_0 = arith.constant 0 : i32
    return %arg0, %c0_i32 : i32, i32
  }
}

</mosaic_0001>

<llo_original>
// kernel: encode.1
$region0: #{encode.1}
  #allocation0 [shape = 'u32[]', space=smem, size = 0x4, offset = 0x4, fixed_abs, tag = 'smem constant byte address 0x4 - core index']
  #allocation1 [shape = 'u32[144,128]{1,0:T(1,128)}', space=vmem, size = 0x12000, scoped, tag = 'internal scratch']
  %s0 = inlined_call_operand.vmem [shape: f32[2,1024], index: 0, kind: input, shape index: {}]
  %s1 = inlined_call_operand.hbm [shape: f32[1024,512], index: 1, kind: input, shape index: {}]
  %s2 = inlined_call_operand.hbm [shape: f32[1,512], index: 2, kind: input, shape index: {}]
  %s3 = inlined_call_operand.hbm [shape: f32[512,256], index: 3, kind: input, shape index: {}]
  %s4 = inlined_call_operand.hbm [shape: f32[1,256], index: 4, kind: input, shape index: {}]
  %s5 = inlined_call_operand.hbm [shape: f32[256,128], index: 5, kind: input, shape index: {}]
  %s6 = inlined_call_operand.hbm [shape: f32[1,128], index: 6, kind: input, shape index: {}]
  %s7 = inlined_call_operand.vmem [shape: f32[2,128], index: 7, kind: output, shape index: {}]
  %s8 = sld [smem:[#allocation0]]
  $region62: #{encode.1} parent=0
    _
  %s10 = ssub.s32 1, %s8
  %s11 = scalar_select 0, %s10, %s8
  $region1: #{encode.1} parent=0
    #allocation2 [shape = 'u8[2097152]{0}', space=vmem, size = 0x200000, scoped, tag = 'input window, operand 1, single buffered']
    #allocation3 [shape = 's32[1]{0}', space=sflag, size = 0x4, scoped, tag = 'scoped memory for encode.1']
    #allocation4 [shape = 'u8[2048]{0}', space=vmem, size = 0x800, scoped, tag = 'input window, operand 2, single buffered']
    #allocation5 [shape = 's32[1]{0}', space=sflag, size = 0x4, scoped, tag = 'scoped memory for encode.1']
    #allocation6 [shape = 'u8[524288]{0}', space=vmem, size = 0x80000, scoped, tag = 'input window, operand 3, single buffered']
    #allocation7 [shape = 'u8[1024]{0}', space=vmem, size = 0x400, scoped, tag = 'input window, operand 4, single buffered']
    #allocation8 [shape = 's32[1]{0}', space=sflag, size = 0x4, scoped, tag = 'scoped memory for encode.1']
    #allocation9 [shape = 'u8[131072]{0}', space=vmem, size = 0x20000, scoped, tag = 'input window, operand 5, single buffered']
    #allocation10 [shape = 'u8[512]{0}', space=vmem, size = 0x400, scoped, tag = 'input window, operand 6, single buffered']
    #allocation11 [shape = 's32[1]{0}', space=sflag, size = 0x4, scoped, tag = 'scoped memory for encode.1']
    %12 = vsyncpa [#allocation3], 0
    %13 = vsyncpa [#allocation5], 0
    %14 = vsyncpa [#allocation8], 0
    %15 = vsyncpa [#allocation11], 0
    // Predicated region
    $region2: #{encode.1} parent=1 // pred_check
      _
    $region3: #{encode.1} parent=1 // pred_check_branch
      %17 = sbr.rel (0) target = $region5
    $region4: #{encode.1} parent=1 // pred_region
      _
    $region5: #{encode.1} parent=1 // pred_fallthru
      _
    // Predicated region
    $region6: #{encode.1} parent=1 // pred_check
      _
    $region7: #{encode.1} parent=1 // pred_check_branch
      %19 = sbr.rel (0) target = $region9
    $region8: #{encode.1} parent=1 // pred_region
      %s21 = ssub.s32 65536, 65536
      %22 = vsyncadd [#allocation3], %s21
      %s23 = sshll.u32 [#allocation2], 4
      %s24 = int_to_ptr.vmem [resolvable:$true] %s23
      %29 = dma.hbm_to_vmem [thread:$0]  %s1, 65536, %s24, [#allocation3], 512, 512, 32
    $region9: #{encode.1} parent=1 // pred_fallthru
      _
    // Predicated region
    $region10: #{encode.1} parent=1 // pred_check
      _
    $region11: #{encode.1} parent=1 // pred_check_branch
      %31 = sbr.rel (0) target = $region13
    $region12: #{encode.1} parent=1 // pred_region
      %s33 = ssub.s32 64, 64
      %34 = vsyncadd [#allocation5], %s33
      %s36 = sshll.u32 [#allocation4], 4
      %s37 = int_to_ptr.vmem [resolvable:$true] %s36
      %39 = dma.hbm_to_vmem [thread:$0]  %s2, 64, %s37, [#allocation5]
    $region13: #{encode.1} parent=1 // pred_fallthru
      _
    // Predicated region
    $region14: #{encode.1} parent=1 // pred_check
      _
    $region15: #{encode.1} parent=1 // pred_check_branch
      %41 = sbr.rel (0) target = $region17
    $region16: #{encode.1} parent=1 // pred_region
      %s43 = ssub.s32 16384, 16384
      %44 = vsyncadd [#allocation5], %s43
      %s45 = sshll.u32 [#allocation6], 4
      %s46 = int_to_ptr.vmem [resolvable:$true] %s45
      %51 = dma.hbm_to_vmem [thread:$0]  %s3, 16384, %s46, [#allocation5], 256, 256, 16
    $region17: #{encode.1} parent=1 // pred_fallthru
      _
    // Predicated region
    $region18: #{encode.1} parent=1 // pred_check
      _
    $region19: #{encode.1} parent=1 // pred_check_branch
      %53 = sbr.rel (0) target = $region21
    $region20: #{encode.1} parent=1 // pred_region
      %s55 = ssub.s32 32, 32
      %56 = vsyncadd [#allocation8], %s55
      %s58 = sshll.u32 [#allocation7], 4
      %s59 = int_to_ptr.vmem [resolvable:$true] %s58
      %61 = dma.hbm_to_vmem [thread:$0]  %s4, 32, %s59, [#allocation8]
    $region21: #{encode.1} parent=1 // pred_fallthru
      _
    // Predicated region
    $region22: #{encode.1} parent=1 // pred_check
      _
    $region23: #{encode.1} parent=1 // pred_check_branch
      %63 = sbr.rel (0) target = $region25
    $region24: #{encode.1} parent=1 // pred_region
      %s65 = ssub.s32 4096, 4096
      %66 = vsyncadd [#allocation8], %s65
      %s67 = sshll.u32 [#allocation9], 4
      %s68 = int_to_ptr.vmem [resolvable:$true] %s67
      %73 = dma.hbm_to_vmem [thread:$0]  %s5, 4096, %s68, [#allocation8], 128, 128, 8
    $region25: #{encode.1} parent=1 // pred_fallthru
      _
    // Predicated region
    $region26: #{encode.1} parent=1 // pred_check
      _
    $region27: #{encode.1} parent=1 // pred_check_branch
      %75 = sbr.rel (0) target = $region29
    $region28: #{encode.1} parent=1 // pred_region
      %s77 = ssub.s32 16, 16
      %78 = vsyncadd [#allocation11], %s77
      %s80 = sshll.u32 [#allocation10], 4
      %s81 = int_to_ptr.vmem [resolvable:$true] %s80
      %83 = dma.hbm_to_vmem [thread:$0]  %s6, 16, %s81, [#allocation11]
    $region29: #{encode.1} parent=1 // pred_fallthru
      _
    // Predicated region
    $region30: #{encode.1} parent=1 // pred_check
      _
    $region31: #{encode.1} parent=1 // pred_check_branch
      %85 = sbr.rel (0) target = $region33
    $region32: #{encode.1} parent=1 // pred_region
      %86 = dma.done [#allocation3], 65536
    $region33: #{encode.1} parent=1 // pred_fallthru
      _
    // Predicated region
    $region34: #{encode.1} parent=1 // pred_check
      _
    $region35: #{encode.1} parent=1 // pred_check_branch
      %88 = sbr.rel (0) target = $region37
    $region36: #{encode.1} parent=1 // pred_region
      %89 = dma.done [#allocation5], 64
    $region37: #{encode.1} parent=1 // pred_fallthru
      _
    // Predicated region
    $region38: #{encode.1} parent=1 // pred_check
      _
    $region39: #{encode.1} parent=1 // pred_check_branch
      %91 = sbr.rel (0) target = $region41
    $region40: #{encode.1} parent=1 // pred_region
      %92 = dma.done [#allocation5], 16384
    $region41: #{encode.1} parent=1 // pred_fallthru
      _
    // Predicated region
    $region42: #{encode.1} parent=1 // pred_check
      _
    $region43: #{encode.1} parent=1 // pred_check_branch
      %94 = sbr.rel (0) target = $region45
    $region44: #{encode.1} parent=1 // pred_region
      %95 = dma.done [#allocation8], 32
    $region45: #{encode.1} parent=1 // pred_fallthru
      _
    // Predicated region
    $region46: #{encode.1} parent=1 // pred_check
      _
    $region47: #{encode.1} parent=1 // pred_check_branch
      %97 = sbr.rel (0) target = $region49
    $region48: #{encode.1} parent=1 // pred_region
      %98 = dma.done [#allocation8], 4096
    $region49: #{encode.1} parent=1 // pred_fallthru
      _
    // Predicated region
    $region50: #{encode.1} parent=1 // pred_check
      _
    $region51: #{encode.1} parent=1 // pred_check_branch
      %100 = sbr.rel (0) target = $region53
    $region52: #{encode.1} parent=1 // pred_region
      %101 = dma.done [#allocation11], 16
    $region53: #{encode.1} parent=1 // pred_fallthru
      _
    %v102 = vld [vmem:[%s0] sm:$0xff]
    %v103 = vld [vmem:[%s0 + $0x8] sm:$0xff]
    %v104 = vld [vmem:[#allocation2] sm:$0xff]
    %v105 = vld [vmem:[#allocation2 + $0x8] sm:$0xff]
    %v106 = vld [vmem:[#allocation2 + $0x10] sm:$0xff]
    %v107 = vld [vmem:[#allocation2 + $0x18] sm:$0xff]
    %v108 = vld [vmem:[#allocation2 + $0x20] sm:$0xff]
    %v109 = vld [vmem:[#allocation2 + $0x28] sm:$0xff]
    %v110 = vld [vmem:[#allocation2 + $0x30] sm:$0xff]
    %v111 = vld [vmem:[#allocation2 + $0x38] sm:$0xff]
    %v112 = vld [vmem:[#allocation2 + $0x40] sm:$0xff]
    %v113 = vld [vmem:[#allocation2 + $0x48] sm:$0xff]
    %v114 = vld [vmem:[#allocation2 + $0x50] sm:$0xff]
    %v115 = vld [vmem:[#allocation2 + $0x58] sm:$0xff]
    %v116 = vld [vmem:[#allocation2 + $0x60] sm:$0xff]
    %v117 = vld [vmem:[#allocation2 + $0x68] sm:$0xff]
    %v118 = vld [vmem:[#allocation2 + $0x70] sm:$0xff]
    %v119 = vld [vmem:[#allocation2 + $0x78] sm:$0xff]
    %v120 = vld [vmem:[#allocation2 + $0x80] sm:$0xff]
    %v121 = vld [vmem:[#allocation2 + $0x88] sm:$0xff]
    %v122 = vld [vmem:[#allocation2 + $0x90] sm:$0xff]
    %v123 = vld [vmem:[#allocation2 + $0x98] sm:$0xff]
    %v124 = vld [vmem:[#allocation2 + $0xa0] sm:$0xff]
    %v125 = vld [vmem:[#allocation2 + $0xa8] sm:$0xff]
    %v126 = vld [vmem:[#allocation2 + $0xb0] sm:$0xff]
    %v127 = vld [vmem:[#allocation2 + $0xb8] sm:$0xff]
    %v128 = vld [vmem:[#allocation2 + $0xc0] sm:$0xff]
    %v129 = vld [vmem:[#allocation2 + $0xc8] sm:$0xff]
    %v130 = vld [vmem:[#allocation2 + $0xd0] sm:$0xff]
    %v131 = vld [vmem:[#allocation2 + $0xd8] sm:$0xff]
    %v132 = vld [vmem:[#allocation2 + $0xe0] sm:$0xff]
    %v133 = vld [vmem:[#allocation2 + $0xe8] sm:$0xff]
    %v134 = vld [vmem:[#allocation2 + $0xf0] sm:$0xff]
    %v135 = vld [vmem:[#allocation2 + $0xf8] sm:$0xff]
    %v136 = vld [vmem:[#allocation2 + $0x100] sm:$0xff]
    %v137 = vld [vmem:[#allocation2 + $0x108] sm:$0xff]
    %v138 = vld [vmem:[#allocation2 + $0x110] sm:$0xff]
    %v139 = vld [vmem:[#allocation2 + $0x118] sm:$0xff]
    %v140 = vld [vmem:[#allocation2 + $0x120] sm:$0xff]
    %v141 = vld [vmem:[#allocation2 + $0x128] sm:$0xff]
    %v142 = vld [vmem:[#allocation2 + $0x130] sm:$0xff]
    %v143 = vld [vmem:[#allocation2 + $0x138] sm:$0xff]
    %v144 = vld [vmem:[#allocation2 + $0x140] sm:$0xff]
    %v145 = vld [vmem:[#allocation2 + $0x148] sm:$0xff]
    %v146 = vld [vmem:[#allocation2 + $0x150] sm:$0xff]
    %v147 = vld [vmem:[#allocation2 + $0x158] sm:$0xff]
    %v148 = vld [vmem:[#allocation2 + $0x160] sm:$0xff]
    %v149 = vld [vmem:[#allocation2 + $0x168] sm:$0xff]
    %v150 = vld [vmem:[#allocation2 + $0x170] sm:$0xff]
    %v151 = vld [vmem:[#allocation2 + $0x178] sm:$0xff]
    %v152 = vld [vmem:[#allocation2 + $0x180] sm:$0xff]
    %v153 = vld [vmem:[#allocation2 + $0x188] sm:$0xff]
    %v154 = vld [vmem:[#allocation2 + $0x190] sm:$0xff]
    %v155 = vld [vmem:[#allocation2 + $0x198] sm:$0xff]
    %v156 = vld [vmem:[#allocation2 + $0x1a0] sm:$0xff]
    %v157 = vld [vmem:[#allocation2 + $0x1a8] sm:$0xff]
    %v158 = vld [vmem:[#allocation2 + $0x1b0] sm:$0xff]
    %v159 = vld [vmem:[#allocation2 + $0x1b8] sm:$0xff]
    %v160 = vld [vmem:[#allocation2 + $0x1c0] sm:$0xff]
    %v161 = vld [vmem:[#allocation2 + $0x1c8] sm:$0xff]
    %v162 = vld [vmem:[#allocation2 + $0x1d0] sm:$0xff]
    %v163 = vld [vmem:[#allocation2 + $0x1d8] sm:$0xff]
    %v164 = vld [vmem:[#allocation2 + $0x1e0] sm:$0xff]
    %v165 = vld [vmem:[#allocation2 + $0x1e8] sm:$0xff]
    %v166 = vld [vmem:[#allocation2 + $0x1f0] sm:$0xff]
    %v167 = vld [vmem:[#allocation2 + $0x1f8] sm:$0xff]
    %v168 = vld [vmem:[#allocation2 + $0x200] sm:$0xff]
    %v169 = vld [vmem:[#allocation2 + $0x208] sm:$0xff]
    %v170 = vld [vmem:[#allocation2 + $0x210] sm:$0xff]
    %v171 = vld [vmem:[#allocation2 + $0x218] sm:$0xff]
    %v172 = vld [vmem:[#allocation2 + $0x220] sm:$0xff]
    %v173 = vld [vmem:[#allocation2 + $0x228] sm:$0xff]
    %v174 = vld [vmem:[#allocation2 + $0x230] sm:$0xff]
    %v175 = vld [vmem:[#allocation2 + $0x238] sm:$0xff]
    %v176 = vld [vmem:[#allocation2 + $0x240] sm:$0xff]
    %v177 = vld [vmem:[#allocation2 + $0x248] sm:$0xff]
    %v178 = vld [vmem:[#allocation2 + $0x250] sm:$0xff]
    %v179 = vld [vmem:[#allocation2 + $0x258] sm:$0xff]
    %v180 = vld [vmem:[#allocation2 + $0x260] sm:$0xff]
    %v181 = vld [vmem:[#allocation2 + $0x268] sm:$0xff]
    %v182 = vld [vmem:[#allocation2 + $0x270] sm:$0xff]
    %v183 = vld [vmem:[#allocation2 + $0x278] sm:$0xff]
    %v184 = vld [vmem:[#allocation2 + $0x280] sm:$0xff]
    %v185 = vld [vmem:[#allocation2 + $0x288] sm:$0xff]
    %v186 = vld [vmem:[#allocation2 + $0x290] sm:$0xff]
    %v187 = vld [vmem:[#allocation2 + $0x298] sm:$0xff]
    %v188 = vld [vmem:[#allocation2 + $0x2a0] sm:$0xff]
    %v189 = vld [vmem:[#allocation2 + $0x2a8] sm:$0xff]
    %v190 = vld [vmem:[#allocation2 + $0x2b0] sm:$0xff]
    %v191 = vld [vmem:[#allocation2 + $0x2b8] sm:$0xff]
    %v192 = vld [vmem:[#allocation2 + $0x2c0] sm:$0xff]
    %v193 = vld [vmem:[#allocation2 + $0x2c8] sm:$0xff]
    %v194 = vld [vmem:[#allocation2 + $0x2d0] sm:$0xff]
    %v195 = vld [vmem:[#allocation2 + $0x2d8] sm:$0xff]
    %v196 = vld [vmem:[#allocation2 + $0x2e0] sm:$0xff]
    %v197 = vld [vmem:[#allocation2 + $0x2e8] sm:$0xff]
    %v198 = vld [vmem:[#allocation2 + $0x2f0] sm:$0xff]
    %v199 = vld [vmem:[#allocation2 + $0x2f8] sm:$0xff]
    %v200 = vld [vmem:[#allocation2 + $0x300] sm:$0xff]
    %v201 = vld [vmem:[#allocation2 + $0x308] sm:$0xff]
    %v202 = vld [vmem:[#allocation2 + $0x310] sm:$0xff]
    %v203 = vld [vmem:[#allocation2 + $0x318] sm:$0xff]
    %v204 = vld [vmem:[#allocation2 + $0x320] sm:$0xff]
    %v205 = vld [vmem:[#allocation2 + $0x328] sm:$0xff]
    %v206 = vld [vmem:[#allocation2 + $0x330] sm:$0xff]
    %v207 = vld [vmem:[#allocation2 + $0x338] sm:$0xff]
    %v208 = vld [vmem:[#allocation2 + $0x340] sm:$0xff]
    %v209 = vld [vmem:[#allocation2 + $0x348] sm:$0xff]
    %v210 = vld [vmem:[#allocation2 + $0x350] sm:$0xff]
    %v211 = vld [vmem:[#allocation2 + $0x358] sm:$0xff]
    %v212 = vld [vmem:[#allocation2 + $0x360] sm:$0xff]
    %v213 = vld [vmem:[#allocation2 + $0x368] sm:$0xff]
    %v214 = vld [vmem:[#allocation2 + $0x370] sm:$0xff]
    %v215 = vld [vmem:[#allocation2 + $0x378] sm:$0xff]
    %v216 = vld [vmem:[#allocation2 + $0x380] sm:$0xff]
    %v217 = vld [vmem:[#allocation2 + $0x388] sm:$0xff]
    %v218 = vld [vmem:[#allocation2 + $0x390] sm:$0xff]
    %v219 = vld [vmem:[#allocation2 + $0x398] sm:$0xff]
    %v220 = vld [vmem:[#allocation2 + $0x3a0] sm:$0xff]
    %v221 = vld [vmem:[#allocation2 + $0x3a8] sm:$0xff]
    %v222 = vld [vmem:[#allocation2 + $0x3b0] sm:$0xff]
    %v223 = vld [vmem:[#allocation2 + $0x3b8] sm:$0xff]
    %v224 = vld [vmem:[#allocation2 + $0x3c0] sm:$0xff]
    %v225 = vld [vmem:[#allocation2 + $0x3c8] sm:$0xff]
    %v226 = vld [vmem:[#allocation2 + $0x3d0] sm:$0xff]
    %v227 = vld [vmem:[#allocation2 + $0x3d8] sm:$0xff]
    %v228 = vld [vmem:[#allocation2 + $0x3e0] sm:$0xff]
    %v229 = vld [vmem:[#allocation2 + $0x3e8] sm:$0xff]
    %v230 = vld [vmem:[#allocation2 + $0x3f0] sm:$0xff]
    %v231 = vld [vmem:[#allocation2 + $0x3f8] sm:$0xff]
    %v232 = vld [vmem:[#allocation2 + $0x400] sm:$0xff]
    %v233 = vld [vmem:[#allocation2 + $0x408] sm:$0xff]
    %v234 = vld [vmem:[#allocation2 + $0x410] sm:$0xff]
    %v235 = vld [vmem:[#allocation2 + $0x418] sm:$0xff]
    %v236 = vld [vmem:[#allocation2 + $0x420] sm:$0xff]
    %v237 = vld [vmem:[#allocation2 + $0x428] sm:$0xff]
    %v238 = vld [vmem:[#allocation2 + $0x430] sm:$0xff]
    %v239 = vld [vmem:[#allocation2 + $0x438] sm:$0xff]
    %v240 = vld [vmem:[#allocation2 + $0x440] sm:$0xff]
    %v241 = vld [vmem:[#allocation2 + $0x448] sm:$0xff]
    %v242 = vld [vmem:[#allocation2 + $0x450] sm:$0xff]
    %v243 = vld [vmem:[#allocation2 + $0x458] sm:$0xff]
    %v244 = vld [vmem:[#allocation2 + $0x460] sm:$0xff]
    %v245 = vld [vmem:[#allocation2 + $0x468] sm:$0xff]
    %v246 = vld [vmem:[#allocation2 + $0x470] sm:$0xff]
    %v247 = vld [vmem:[#allocation2 + $0x478] sm:$0xff]
    %v248 = vld [vmem:[#allocation2 + $0x480] sm:$0xff]
    %v249 = vld [vmem:[#allocation2 + $0x488] sm:$0xff]
    %v250 = vld [vmem:[#allocation2 + $0x490] sm:$0xff]
    %v251 = vld [vmem:[#allocation2 + $0x498] sm:$0xff]
    %v252 = vld [vmem:[#allocation2 + $0x4a0] sm:$0xff]
    %v253 = vld [vmem:[#allocation2 + $0x4a8] sm:$0xff]
    %v254 = vld [vmem:[#allocation2 + $0x4b0] sm:$0xff]
    %v255 = vld [vmem:[#allocation2 + $0x4b8] sm:$0xff]
    %v256 = vld [vmem:[#allocation2 + $0x4c0] sm:$0xff]
    %v257 = vld [vmem:[#allocation2 + $0x4c8] sm:$0xff]
    %v258 = vld [vmem:[#allocation2 + $0x4d0] sm:$0xff]
    %v259 = vld [vmem:[#allocation2 + $0x4d8] sm:$0xff]
    %v260 = vld [vmem:[#allocation2 + $0x4e0] sm:$0xff]
    %v261 = vld [vmem:[#allocation2 + $0x4e8] sm:$0xff]
    %v262 = vld [vmem:[#allocation2 + $0x4f0] sm:$0xff]
    %v263 = vld [vmem:[#allocation2 + $0x4f8] sm:$0xff]
    %v264 = vld [vmem:[#allocation2 + $0x500] sm:$0xff]
    %v265 = vld [vmem:[#allocation2 + $0x508] sm:$0xff]
    %v266 = vld [vmem:[#allocation2 + $0x510] sm:$0xff]
    %v267 = vld [vmem:[#allocation2 + $0x518] sm:$0xff]
    %v268 = vld [vmem:[#allocation2 + $0x520] sm:$0xff]
    %v269 = vld [vmem:[#allocation2 + $0x528] sm:$0xff]
    %v270 = vld [vmem:[#allocation2 + $0x530] sm:$0xff]
    %v271 = vld [vmem:[#allocation2 + $0x538] sm:$0xff]
    %v272 = vld [vmem:[#allocation2 + $0x540] sm:$0xff]
    %v273 = vld [vmem:[#allocation2 + $0x548] sm:$0xff]
    %v274 = vld [vmem:[#allocation2 + $0x550] sm:$0xff]
    %v275 = vld [vmem:[#allocation2 + $0x558] sm:$0xff]
    %v276 = vld [vmem:[#allocation2 + $0x560] sm:$0xff]
    %v277 = vld [vmem:[#allocation2 + $0x568] sm:$0xff]
    %v278 = vld [vmem:[#allocation2 + $0x570] sm:$0xff]
    %v279 = vld [vmem:[#allocation2 + $0x578] sm:$0xff]
    %v280 = vld [vmem:[#allocation2 + $0x580] sm:$0xff]
    %v281 = vld [vmem:[#allocation2 + $0x588] sm:$0xff]
    %v282 = vld [vmem:[#allocation2 + $0x590] sm:$0xff]
    %v283 = vld [vmem:[#allocation2 + $0x598] sm:$0xff]
    %v284 = vld [vmem:[#allocation2 + $0x5a0] sm:$0xff]
    %v285 = vld [vmem:[#allocation2 + $0x5a8] sm:$0xff]
    %v286 = vld [vmem:[#allocation2 + $0x5b0] sm:$0xff]
    %v287 = vld [vmem:[#allocation2 + $0x5b8] sm:$0xff]
    %v288 = vld [vmem:[#allocation2 + $0x5c0] sm:$0xff]
    %v289 = vld [vmem:[#allocation2 + $0x5c8] sm:$0xff]
    %v290 = vld [vmem:[#allocation2 + $0x5d0] sm:$0xff]
    %v291 = vld [vmem:[#allocation2 + $0x5d8] sm:$0xff]
    %v292 = vld [vmem:[#allocation2 + $0x5e0] sm:$0xff]
    %v293 = vld [vmem:[#allocation2 + $0x5e8] sm:$0xff]
    %v294 = vld [vmem:[#allocation2 + $0x5f0] sm:$0xff]
    %v295 = vld [vmem:[#allocation2 + $0x5f8] sm:$0xff]
    %v296 = vld [vmem:[#allocation2 + $0x600] sm:$0xff]
    %v297 = vld [vmem:[#allocation2 + $0x608] sm:$0xff]
    %v298 = vld [vmem:[#allocation2 + $0x610] sm:$0xff]
    %v299 = vld [vmem:[#allocation2 + $0x618] sm:$0xff]
    %v300 = vld [vmem:[#allocation2 + $0x620] sm:$0xff]
    %v301 = vld [vmem:[#allocation2 + $0x628] sm:$0xff]
    %v302 = vld [vmem:[#allocation2 + $0x630] sm:$0xff]
    %v303 = vld [vmem:[#allocation2 + $0x638] sm:$0xff]
    %v304 = vld [vmem:[#allocation2 + $0x640] sm:$0xff]
    %v305 = vld [vmem:[#allocation2 + $0x648] sm:$0xff]
    %v306 = vld [vmem:[#allocation2 + $0x650] sm:$0xff]
    %v307 = vld [vmem:[#allocation2 + $0x658] sm:$0xff]
    %v308 = vld [vmem:[#allocation2 + $0x660] sm:$0xff]
    %v309 = vld [vmem:[#allocation2 + $0x668] sm:$0xff]
    %v310 = vld [vmem:[#allocation2 + $0x670] sm:$0xff]
    %v311 = vld [vmem:[#allocation2 + $0x678] sm:$0xff]
    %v312 = vld [vmem:[#allocation2 + $0x680] sm:$0xff]
    %v313 = vld [vmem:[#allocation2 + $0x688] sm:$0xff]
    %v314 = vld [vmem:[#allocation2 + $0x690] sm:$0xff]
    %v315 = vld [vmem:[#allocation2 + $0x698] sm:$0xff]
    %v316 = vld [vmem:[#allocation2 + $0x6a0] sm:$0xff]
    %v317 = vld [vmem:[#allocation2 + $0x6a8] sm:$0xff]
    %v318 = vld [vmem:[#allocation2 + $0x6b0] sm:$0xff]
    %v319 = vld [vmem:[#allocation2 + $0x6b8] sm:$0xff]
    %v320 = vld [vmem:[#allocation2 + $0x6c0] sm:$0xff]
    %v321 = vld [vmem:[#allocation2 + $0x6c8] sm:$0xff]
    %v322 = vld [vmem:[#allocation2 + $0x6d0] sm:$0xff]
    %v323 = vld [vmem:[#allocation2 + $0x6d8] sm:$0xff]
    %v324 = vld [vmem:[#allocation2 + $0x6e0] sm:$0xff]
    %v325 = vld [vmem:[#allocation2 + $0x6e8] sm:$0xff]
    %v326 = vld [vmem:[#allocation2 + $0x6f0] sm:$0xff]
    %v327 = vld [vmem:[#allocation2 + $0x6f8] sm:$0xff]
    %v328 = vld [vmem:[#allocation2 + $0x700] sm:$0xff]
    %v329 = vld [vmem:[#allocation2 + $0x708] sm:$0xff]
    %v330 = vld [vmem:[#allocation2 + $0x710] sm:$0xff]
    %v331 = vld [vmem:[#allocation2 + $0x718] sm:$0xff]
    %v332 = vld [vmem:[#allocation2 + $0x720] sm:$0xff]
    %v333 = vld [vmem:[#allocation2 + $0x728] sm:$0xff]
    %v334 = vld [vmem:[#allocation2 + $0x730] sm:$0xff]
    %v335 = vld [vmem:[#allocation2 + $0x738] sm:$0xff]
    %v336 = vld [vmem:[#allocation2 + $0x740] sm:$0xff]
    %v337 = vld [vmem:[#allocation2 + $0x748] sm:$0xff]
    %v338 = vld [vmem:[#allocation2 + $0x750] sm:$0xff]
    %v339 = vld [vmem:[#allocation2 + $0x758] sm:$0xff]
    %v340 = vld [vmem:[#allocation2 + $0x760] sm:$0xff]
    %v341 = vld [vmem:[#allocation2 + $0x768] sm:$0xff]
    %v342 = vld [vmem:[#allocation2 + $0x770] sm:$0xff]
    %v343 = vld [vmem:[#allocation2 + $0x778] sm:$0xff]
    %v344 = vld [vmem:[#allocation2 + $0x780] sm:$0xff]
    %v345 = vld [vmem:[#allocation2 + $0x788] sm:$0xff]
    %v346 = vld [vmem:[#allocation2 + $0x790] sm:$0xff]
    %v347 = vld [vmem:[#allocation2 + $0x798] sm:$0xff]
    %v348 = vld [vmem:[#allocation2 + $0x7a0] sm:$0xff]
    %v349 = vld [vmem:[#allocation2 + $0x7a8] sm:$0xff]
    %v350 = vld [vmem:[#allocation2 + $0x7b0] sm:$0xff]
    %v351 = vld [vmem:[#allocation2 + $0x7b8] sm:$0xff]
    %v352 = vld [vmem:[#allocation2 + $0x7c0] sm:$0xff]
    %v353 = vld [vmem:[#allocation2 + $0x7c8] sm:$0xff]
    %v354 = vld [vmem:[#allocation2 + $0x7d0] sm:$0xff]
    %v355 = vld [vmem:[#allocation2 + $0x7d8] sm:$0xff]
    %v356 = vld [vmem:[#allocation2 + $0x7e0] sm:$0xff]
    %v357 = vld [vmem:[#allocation2 + $0x7e8] sm:$0xff]
    %v358 = vld [vmem:[#allocation2 + $0x7f0] sm:$0xff]
    %v359 = vld [vmem:[#allocation2 + $0x7f8] sm:$0xff]
    %v360 = vld [vmem:[#allocation2 + $0x800] sm:$0xff]
    %v361 = vld [vmem:[#allocation2 + $0x808] sm:$0xff]
    %v362 = vld [vmem:[#allocation2 + $0x810] sm:$0xff]
    %v363 = vld [vmem:[#allocation2 + $0x818] sm:$0xff]
    %v364 = vld [vmem:[#allocation2 + $0x820] sm:$0xff]
    %v365 = vld [vmem:[#allocation2 + $0x828] sm:$0xff]
    %v366 = vld [vmem:[#allocation2 + $0x830] sm:$0xff]
    %v367 = vld [vmem:[#allocation2 + $0x838] sm:$0xff]
    %v368 = vld [vmem:[#allocation2 + $0x840] sm:$0xff]
    %v369 = vld [vmem:[#allocation2 + $0x848] sm:$0xff]
    %v370 = vld [vmem:[#allocation2 + $0x850] sm:$0xff]
    %v371 = vld [vmem:[#allocation2 + $0x858] sm:$0xff]
    %v372 = vld [vmem:[#allocation2 + $0x860] sm:$0xff]
    %v373 = vld [vmem:[#allocation2 + $0x868] sm:$0xff]
    %v374 = vld [vmem:[#allocation2 + $0x870] sm:$0xff]
    %v375 = vld [vmem:[#allocation2 + $0x878] sm:$0xff]
    %v376 = vld [vmem:[#allocation2 + $0x880] sm:$0xff]
    %v377 = vld [vmem:[#allocation2 + $0x888] sm:$0xff]
    %v378 = vld [vmem:[#allocation2 + $0x890] sm:$0xff]
    %v379 = vld [vmem:[#allocation2 + $0x898] sm:$0xff]
    %v380 = vld [vmem:[#allocation2 + $0x8a0] sm:$0xff]
    %v381 = vld [vmem:[#allocation2 + $0x8a8] sm:$0xff]
    %v382 = vld [vmem:[#allocation2 + $0x8b0] sm:$0xff]
    %v383 = vld [vmem:[#allocation2 + $0x8b8] sm:$0xff]
    %v384 = vld [vmem:[#allocation2 + $0x8c0] sm:$0xff]
    %v385 = vld [vmem:[#allocation2 + $0x8c8] sm:$0xff]
    %v386 = vld [vmem:[#allocation2 + $0x8d0] sm:$0xff]
    %v387 = vld [vmem:[#allocation2 + $0x8d8] sm:$0xff]
    %v388 = vld [vmem:[#allocation2 + $0x8e0] sm:$0xff]
    %v389 = vld [vmem:[#allocation2 + $0x8e8] sm:$0xff]
    %v390 = vld [vmem:[#allocation2 + $0x8f0] sm:$0xff]
    %v391 = vld [vmem:[#allocation2 + $0x8f8] sm:$0xff]
    %v392 = vld [vmem:[#allocation2 + $0x900] sm:$0xff]
    %v393 = vld [vmem:[#allocation2 + $0x908] sm:$0xff]
    %v394 = vld [vmem:[#allocation2 + $0x910] sm:$0xff]
    %v395 = vld [vmem:[#allocation2 + $0x918] sm:$0xff]
    %v396 = vld [vmem:[#allocation2 + $0x920] sm:$0xff]
    %v397 = vld [vmem:[#allocation2 + $0x928] sm:$0xff]
    %v398 = vld [vmem:[#allocation2 + $0x930] sm:$0xff]
    %v399 = vld [vmem:[#allocation2 + $0x938] sm:$0xff]
    %v400 = vld [vmem:[#allocation2 + $0x940] sm:$0xff]
    %v401 = vld [vmem:[#allocation2 + $0x948] sm:$0xff]
    %v402 = vld [vmem:[#allocation2 + $0x950] sm:$0xff]
    %v403 = vld [vmem:[#allocation2 + $0x958] sm:$0xff]
    %v404 = vld [vmem:[#allocation2 + $0x960] sm:$0xff]
    %v405 = vld [vmem:[#allocation2 + $0x968] sm:$0xff]
    %v406 = vld [vmem:[#allocation2 + $0x970] sm:$0xff]
    %v407 = vld [vmem:[#allocation2 + $0x978] sm:$0xff]
    %v408 = vld [vmem:[#allocation2 + $0x980] sm:$0xff]
    %v409 = vld [vmem:[#allocation2 + $0x988] sm:$0xff]
    %v410 = vld [vmem:[#allocation2 + $0x990] sm:$0xff]
    %v411 = vld [vmem:[#allocation2 + $0x998] sm:$0xff]
    %v412 = vld [vmem:[#allocation2 + $0x9a0] sm:$0xff]
    %v413 = vld [vmem:[#allocation2 + $0x9a8] sm:$0xff]
    %v414 = vld [vmem:[#allocation2 + $0x9b0] sm:$0xff]
    %v415 = vld [vmem:[#allocation2 + $0x9b8] sm:$0xff]
    %v416 = vld [vmem:[#allocation2 + $0x9c0] sm:$0xff]
    %v417 = vld [vmem:[#allocation2 + $0x9c8] sm:$0xff]
    %v418 = vld [vmem:[#allocation2 + $0x9d0] sm:$0xff]
    %v419 = vld [vmem:[#allocation2 + $0x9d8] sm:$0xff]
    %v420 = vld [vmem:[#allocation2 + $0x9e0] sm:$0xff]
    %v421 = vld [vmem:[#allocation2 + $0x9e8] sm:$0xff]
    %v422 = vld [vmem:[#allocation2 + $0x9f0] sm:$0xff]
    %v423 = vld [vmem:[#allocation2 + $0x9f8] sm:$0xff]
    %v424 = vld [vmem:[#allocation2 + $0xa00] sm:$0xff]
    %v425 = vld [vmem:[#allocation2 + $0xa08] sm:$0xff]
    %v426 = vld [vmem:[#allocation2 + $0xa10] sm:$0xff]
    %v427 = vld [vmem:[#allocation2 + $0xa18] sm:$0xff]
    %v428 = vld [vmem:[#allocation2 + $0xa20] sm:$0xff]
    %v429 = vld [vmem:[#allocation2 + $0xa28] sm:$0xff]
    %v430 = vld [vmem:[#allocation2 + $0xa30] sm:$0xff]
    %v431 = vld [vmem:[#allocation2 + $0xa38] sm:$0xff]
    %v432 = vld [vmem:[#allocation2 + $0xa40] sm:$0xff]
    %v433 = vld [vmem:[#allocation2 + $0xa48] sm:$0xff]
    %v434 = vld [vmem:[#allocation2 + $0xa50] sm:$0xff]
    %v435 = vld [vmem:[#allocation2 + $0xa58] sm:$0xff]
    %v436 = vld [vmem:[#allocation2 + $0xa60] sm:$0xff]
    %v437 = vld [vmem:[#allocation2 + $0xa68] sm:$0xff]
    %v438 = vld [vmem:[#allocation2 + $0xa70] sm:$0xff]
    %v439 = vld [vmem:[#allocation2 + $0xa78] sm:$0xff]
    %v440 = vld [vmem:[#allocation2 + $0xa80] sm:$0xff]
    %v441 = vld [vmem:[#allocation2 + $0xa88] sm:$0xff]
    %v442 = vld [vmem:[#allocation2 + $0xa90] sm:$0xff]
    %v443 = vld [vmem:[#allocation2 + $0xa98] sm:$0xff]
    %v444 = vld [vmem:[#allocation2 + $0xaa0] sm:$0xff]
    %v445 = vld [vmem:[#allocation2 + $0xaa8] sm:$0xff]
    %v446 = vld [vmem:[#allocation2 + $0xab0] sm:$0xff]
    %v447 = vld [vmem:[#allocation2 + $0xab8] sm:$0xff]
    %v448 = vld [vmem:[#allocation2 + $0xac0] sm:$0xff]
    %v449 = vld [vmem:[#allocation2 + $0xac8] sm:$0xff]
    %v450 = vld [vmem:[#allocation2 + $0xad0] sm:$0xff]
    %v451 = vld [vmem:[#allocation2 + $0xad8] sm:$0xff]
    %v452 = vld [vmem:[#allocation2 + $0xae0] sm:$0xff]
    %v453 = vld [vmem:[#allocation2 + $0xae8] sm:$0xff]
    %v454 = vld [vmem:[#allocation2 + $0xaf0] sm:$0xff]
    %v455 = vld [vmem:[#allocation2 + $0xaf8] sm:$0xff]
    %v456 = vld [vmem:[#allocation2 + $0xb00] sm:$0xff]
    %v457 = vld [vmem:[#allocation2 + $0xb08] sm:$0xff]
    %v458 = vld [vmem:[#allocation2 + $0xb10] sm:$0xff]
    %v459 = vld [vmem:[#allocation2 + $0xb18] sm:$0xff]
    %v460 = vld [vmem:[#allocation2 + $0xb20] sm:$0xff]
    %v461 = vld [vmem:[#allocation2 + $0xb28] sm:$0xff]
    %v462 = vld [vmem:[#allocation2 + $0xb30] sm:$0xff]
    %v463 = vld [vmem:[#allocation2 + $0xb38] sm:$0xff]
    %v464 = vld [vmem:[#allocation2 + $0xb40] sm:$0xff]
    %v465 = vld [vmem:[#allocation2 + $0xb48] sm:$0xff]
    %v466 = vld [vmem:[#allocation2 + $0xb50] sm:$0xff]
    %v467 = vld [vmem:[#allocation2 + $0xb58] sm:$0xff]
    %v468 = vld [vmem:[#allocation2 + $0xb60] sm:$0xff]
    %v469 = vld [vmem:[#allocation2 + $0xb68] sm:$0xff]
    %v470 = vld [vmem:[#allocation2 + $0xb70] sm:$0xff]
    %v471 = vld [vmem:[#allocation2 + $0xb78] sm:$0xff]
    %v472 = vld [vmem:[#allocation2 + $0xb80] sm:$0xff]
    %v473 = vld [vmem:[#allocation2 + $0xb88] sm:$0xff]
    %v474 = vld [vmem:[#allocation2 + $0xb90] sm:$0xff]
    %v475 = vld [vmem:[#allocation2 + $0xb98] sm:$0xff]
    %v476 = vld [vmem:[#allocation2 + $0xba0] sm:$0xff]
    %v477 = vld [vmem:[#allocation2 + $0xba8] sm:$0xff]
    %v478 = vld [vmem:[#allocation2 + $0xbb0] sm:$0xff]
    %v479 = vld [vmem:[#allocation2 + $0xbb8] sm:$0xff]
    %v480 = vld [vmem:[#allocation2 + $0xbc0] sm:$0xff]
    %v481 = vld [vmem:[#allocation2 + $0xbc8] sm:$0xff]
    %v482 = vld [vmem:[#allocation2 + $0xbd0] sm:$0xff]
    %v483 = vld [vmem:[#allocation2 + $0xbd8] sm:$0xff]
    %v484 = vld [vmem:[#allocation2 + $0xbe0] sm:$0xff]
    %v485 = vld [vmem:[#allocation2 + $0xbe8] sm:$0xff]
    %v486 = vld [vmem:[#allocation2 + $0xbf0] sm:$0xff]
    %v487 = vld [vmem:[#allocation2 + $0xbf8] sm:$0xff]
    %v488 = vld [vmem:[#allocation2 + $0xc00] sm:$0xff]
    %v489 = vld [vmem:[#allocation2 + $0xc08] sm:$0xff]
    %v490 = vld [vmem:[#allocation2 + $0xc10] sm:$0xff]
    %v491 = vld [vmem:[#allocation2 + $0xc18] sm:$0xff]
    %v492 = vld [vmem:[#allocation2 + $0xc20] sm:$0xff]
    %v493 = vld [vmem:[#allocation2 + $0xc28] sm:$0xff]
    %v494 = vld [vmem:[#allocation2 + $0xc30] sm:$0xff]
    %v495 = vld [vmem:[#allocation2 + $0xc38] sm:$0xff]
    %v496 = vld [vmem:[#allocation2 + $0xc40] sm:$0xff]
    %v497 = vld [vmem:[#allocation2 + $0xc48] sm:$0xff]
    %v498 = vld [vmem:[#allocation2 + $0xc50] sm:$0xff]
    %v499 = vld [vmem:[#allocation2 + $0xc58] sm:$0xff]
    %v500 = vld [vmem:[#allocation2 + $0xc60] sm:$0xff]
    %v501 = vld [vmem:[#allocation2 + $0xc68] sm:$0xff]
    %v502 = vld [vmem:[#allocation2 + $0xc70] sm:$0xff]
    %v503 = vld [vmem:[#allocation2 + $0xc78] sm:$0xff]
    %v504 = vld [vmem:[#allocation2 + $0xc80] sm:$0xff]
    %v505 = vld [vmem:[#allocation2 + $0xc88] sm:$0xff]
    %v506 = vld [vmem:[#allocation2 + $0xc90] sm:$0xff]
    %v507 = vld [vmem:[#allocation2 + $0xc98] sm:$0xff]
    %v508 = vld [vmem:[#allocation2 + $0xca0] sm:$0xff]
    %v509 = vld [vmem:[#allocation2 + $0xca8] sm:$0xff]
    %v510 = vld [vmem:[#allocation2 + $0xcb0] sm:$0xff]
    %v511 = vld [vmem:[#allocation2 + $0xcb8] sm:$0xff]
    %v512 = vld [vmem:[#allocation2 + $0xcc0] sm:$0xff]
    %v513 = vld [vmem:[#allocation2 + $0xcc8] sm:$0xff]
    %v514 = vld [vmem:[#allocation2 + $0xcd0] sm:$0xff]
    %v515 = vld [vmem:[#allocation2 + $0xcd8] sm:$0xff]
    %v516 = vld [vmem:[#allocation2 + $0xce0] sm:$0xff]
    %v517 = vld [vmem:[#allocation2 + $0xce8] sm:$0xff]
    %v518 = vld [vmem:[#allocation2 + $0xcf0] sm:$0xff]
    %v519 = vld [vmem:[#allocation2 + $0xcf8] sm:$0xff]
    %v520 = vld [vmem:[#allocation2 + $0xd00] sm:$0xff]
    %v521 = vld [vmem:[#allocation2 + $0xd08] sm:$0xff]
    %v522 = vld [vmem:[#allocation2 + $0xd10] sm:$0xff]
    %v523 = vld [vmem:[#allocation2 + $0xd18] sm:$0xff]
    %v524 = vld [vmem:[#allocation2 + $0xd20] sm:$0xff]
    %v525 = vld [vmem:[#allocation2 + $0xd28] sm:$0xff]
    %v526 = vld [vmem:[#allocation2 + $0xd30] sm:$0xff]
    %v527 = vld [vmem:[#allocation2 + $0xd38] sm:$0xff]
    %v528 = vld [vmem:[#allocation2 + $0xd40] sm:$0xff]
    %v529 = vld [vmem:[#allocation2 + $0xd48] sm:$0xff]
    %v530 = vld [vmem:[#allocation2 + $0xd50] sm:$0xff]
    %v531 = vld [vmem:[#allocation2 + $0xd58] sm:$0xff]
    %v532 = vld [vmem:[#allocation2 + $0xd60] sm:$0xff]
    %v533 = vld [vmem:[#allocation2 + $0xd68] sm:$0xff]
    %v534 = vld [vmem:[#allocation2 + $0xd70] sm:$0xff]
    %v535 = vld [vmem:[#allocation2 + $0xd78] sm:$0xff]
    %v536 = vld [vmem:[#allocation2 + $0xd80] sm:$0xff]
    %v537 = vld [vmem:[#allocation2 + $0xd88] sm:$0xff]
    %v538 = vld [vmem:[#allocation2 + $0xd90] sm:$0xff]
    %v539 = vld [vmem:[#allocation2 + $0xd98] sm:$0xff]
    %v540 = vld [vmem:[#allocation2 + $0xda0] sm:$0xff]
    %v541 = vld [vmem:[#allocation2 + $0xda8] sm:$0xff]
    %v542 = vld [vmem:[#allocation2 + $0xdb0] sm:$0xff]
    %v543 = vld [vmem:[#allocation2 + $0xdb8] sm:$0xff]
    %v544 = vld [vmem:[#allocation2 + $0xdc0] sm:$0xff]
    %v545 = vld [vmem:[#allocation2 + $0xdc8] sm:$0xff]
    %v546 = vld [vmem:[#allocation2 + $0xdd0] sm:$0xff]
    %v547 = vld [vmem:[#allocation2 + $0xdd8] sm:$0xff]
    %v548 = vld [vmem:[#allocation2 + $0xde0] sm:$0xff]
    %v549 = vld [vmem:[#allocation2 + $0xde8] sm:$0xff]
    %v550 = vld [vmem:[#allocation2 + $0xdf0] sm:$0xff]
    %v551 = vld [vmem:[#allocation2 + $0xdf8] sm:$0xff]
    %v552 = vld [vmem:[#allocation2 + $0xe00] sm:$0xff]
    %v553 = vld [vmem:[#allocation2 + $0xe08] sm:$0xff]
    %v554 = vld [vmem:[#allocation2 + $0xe10] sm:$0xff]
    %v555 = vld [vmem:[#allocation2 + $0xe18] sm:$0xff]
    %v556 = vld [vmem:[#allocation2 + $0xe20] sm:$0xff]
    %v557 = vld [vmem:[#allocation2 + $0xe28] sm:$0xff]
    %v558 = vld [vmem:[#allocation2 + $0xe30] sm:$0xff]
    %v559 = vld [vmem:[#allocation2 + $0xe38] sm:$0xff]
    %v560 = vld [vmem:[#allocation2 + $0xe40] sm:$0xff]
    %v561 = vld [vmem:[#allocation2 + $0xe48] sm:$0xff]
    %v562 = vld [vmem:[#allocation2 + $0xe50] sm:$0xff]
    %v563 = vld [vmem:[#allocation2 + $0xe58] sm:$0xff]
    %v564 = vld [vmem:[#allocation2 + $0xe60] sm:$0xff]
    %v565 = vld [vmem:[#allocation2 + $0xe68] sm:$0xff]
    %v566 = vld [vmem:[#allocation2 + $0xe70] sm:$0xff]
    %v567 = vld [vmem:[#allocation2 + $0xe78] sm:$0xff]
    %v568 = vld [vmem:[#allocation2 + $0xe80] sm:$0xff]
    %v569 = vld [vmem:[#allocation2 + $0xe88] sm:$0xff]
    %v570 = vld [vmem:[#allocation2 + $0xe90] sm:$0xff]
    %v571 = vld [vmem:[#allocation2 + $0xe98] sm:$0xff]
    %v572 = vld [vmem:[#allocation2 + $0xea0] sm:$0xff]
    %v573 = vld [vmem:[#allocation2 + $0xea8] sm:$0xff]
    %v574 = vld [vmem:[#allocation2 + $0xeb0] sm:$0xff]
    %v575 = vld [vmem:[#allocation2 + $0xeb8] sm:$0xff]
    %v576 = vld [vmem:[#allocation2 + $0xec0] sm:$0xff]
    %v577 = vld [vmem:[#allocation2 + $0xec8] sm:$0xff]
    %v578 = vld [vmem:[#allocation2 + $0xed0] sm:$0xff]
    %v579 = vld [vmem:[#allocation2 + $0xed8] sm:$0xff]
    %v580 = vld [vmem:[#allocation2 + $0xee0] sm:$0xff]
    %v581 = vld [vmem:[#allocation2 + $0xee8] sm:$0xff]
    %v582 = vld [vmem:[#allocation2 + $0xef0] sm:$0xff]
    %v583 = vld [vmem:[#allocation2 + $0xef8] sm:$0xff]
    %v584 = vld [vmem:[#allocation2 + $0xf00] sm:$0xff]
    %v585 = vld [vmem:[#allocation2 + $0xf08] sm:$0xff]
    %v586 = vld [vmem:[#allocation2 + $0xf10] sm:$0xff]
    %v587 = vld [vmem:[#allocation2 + $0xf18] sm:$0xff]
    %v588 = vld [vmem:[#allocation2 + $0xf20] sm:$0xff]
    %v589 = vld [vmem:[#allocation2 + $0xf28] sm:$0xff]
    %v590 = vld [vmem:[#allocation2 + $0xf30] sm:$0xff]
    %v591 = vld [vmem:[#allocation2 + $0xf38] sm:$0xff]
    %v592 = vld [vmem:[#allocation2 + $0xf40] sm:$0xff]
    %v593 = vld [vmem:[#allocation2 + $0xf48] sm:$0xff]
    %v594 = vld [vmem:[#allocation2 + $0xf50] sm:$0xff]
    %v595 = vld [vmem:[#allocation2 + $0xf58] sm:$0xff]
    %v596 = vld [vmem:[#allocation2 + $0xf60] sm:$0xff]
    %v597 = vld [vmem:[#allocation2 + $0xf68] sm:$0xff]
    %v598 = vld [vmem:[#allocation2 + $0xf70] sm:$0xff]
    %v599 = vld [vmem:[#allocation2 + $0xf78] sm:$0xff]
    %v600 = vld [vmem:[#allocation2 + $0xf80] sm:$0xff]
    %v601 = vld [vmem:[#allocation2 + $0xf88] sm:$0xff]
    %v602 = vld [vmem:[#allocation2 + $0xf90] sm:$0xff]
    %v603 = vld [vmem:[#allocation2 + $0xf98] sm:$0xff]
    %v604 = vld [vmem:[#allocation2 + $0xfa0] sm:$0xff]
    %v605 = vld [vmem:[#allocation2 + $0xfa8] sm:$0xff]
    %v606 = vld [vmem:[#allocation2 + $0xfb0] sm:$0xff]
    %v607 = vld [vmem:[#allocation2 + $0xfb8] sm:$0xff]
    %v608 = vld [vmem:[#allocation2 + $0xfc0] sm:$0xff]
    %v609 = vld [vmem:[#allocation2 + $0xfc8] sm:$0xff]
    %v610 = vld [vmem:[#allocation2 + $0xfd0] sm:$0xff]
    %v611 = vld [vmem:[#allocation2 + $0xfd8] sm:$0xff]
    %v612 = vld [vmem:[#allocation2 + $0xfe0] sm:$0xff]
    %v613 = vld [vmem:[#allocation2 + $0xfe8] sm:$0xff]
    %v614 = vld [vmem:[#allocation2 + $0xff0] sm:$0xff]
    %v615 = vld [vmem:[#allocation2 + $0xff8] sm:$0xff]
    %v616 = vld [vmem:[#allocation4] sm:$0xf]
    %v618 = vlaneseq
    %v619 = vshrl.u32 %v618, 7
    %v620 = vsub.s32 0, %v619
    %v621 = vrot.slane %v616, %v620
    %v622 = vlaneseq
    %v623 = vshrl.u32 %v622, 7
    %v624 = vsub.s32 1, %v623
    %v625 = vrot.slane %v616, %v624
    %v626 = vlaneseq
    %v627 = vshrl.u32 %v626, 7
    %v628 = vsub.s32 2, %v627
    %v629 = vrot.slane %v616, %v628
    %v630 = vlaneseq
    %v631 = vshrl.u32 %v630, 7
    %v632 = vsub.s32 3, %v631
    %v633 = vrot.slane %v616, %v632
    %v640 = vcombine.high %v102, %v102
    %v642 = vunpack.c.l.s4 1983009808
    %v643 = vunpack.c.0.s8 %v642
    %v644 = vlaneseq
    %v645 = vshrl.u32 %v644, 7
    %v646 = vsub.s32 %v643, %v645
    %v647 = vrot.slane %v102, %v646
    %v649 = vunpack.c.l.s4 1983009808
    %v650 = vunpack.c.0.s8 %v649
    %v651 = vlaneseq
    %v652 = vshrl.u32 %v651, 7
    %v653 = vsub.s32 %v650, %v652
    %v654 = vrot.slane %v640, %v653
    %v655 = vcombine.high %v647, %v647
    %v656 = vcombine.high %v654, %v654
    %v657 = vcombine.high %v103, %v103
    %v659 = vunpack.c.l.s4 1983009808
    %v660 = vunpack.c.0.s8 %v659
    %v661 = vlaneseq
    %v662 = vshrl.u32 %v661, 7
    %v663 = vsub.s32 %v660, %v662
    %v664 = vrot.slane %v103, %v663
    %v666 = vunpack.c.l.s4 1983009808
    %v667 = vunpack.c.0.s8 %v666
    %v668 = vlaneseq
    %v669 = vshrl.u32 %v668, 7
    %v670 = vsub.s32 %v667, %v669
    %v671 = vrot.slane %v657, %v670
    %v672 = vcombine.high %v664, %v664
    %v673 = vcombine.high %v671, %v671
    %682 = vmatprep.subr.mxu0 %v165
    %683 = vmatpush1.msra.mxu0 %v164
    %684 = vmatprep.subr.mxu0 %v161
    %685 = vmatpush1.msra.mxu0 %v160
    %686 = vmatprep.subr.mxu0 %v157
    %687 = vmatpush1.msra.mxu0 %v156
    %688 = vmatprep.subr.mxu0 %v153
    %689 = vmatpush1.msra.mxu0 %v152
    %690 = vmatprep.subr.mxu0 %v149
    %691 = vmatpush1.msra.mxu0 %v148
    %692 = vmatprep.subr.mxu0 %v145
    %693 = vmatpush1.msra.mxu0 %v144
    %694 = vmatprep.subr.mxu0 %v141
    %695 = vmatpush1.msra.mxu0 %v140
    %696 = vmatprep.subr.mxu0 %v137
    %697 = vmatpush1.msra.mxu0 %v136
    %698 = vmatprep.subr.mxu0 %v133
    %699 = vmatpush1.msra.mxu0 %v132
    %700 = vmatprep.subr.mxu0 %v129
    %701 = vmatpush1.msra.mxu0 %v128
    %702 = vmatprep.subr.mxu0 %v125
    %703 = vmatpush1.msra.mxu0 %v124
    %704 = vmatprep.subr.mxu0 %v121
    %705 = vmatpush1.msra.mxu0 %v120
    %706 = vmatprep.subr.mxu0 %v117
    %707 = vmatpush1.msra.mxu0 %v116
    %708 = vmatprep.subr.mxu0 %v113
    %709 = vmatpush1.msra.mxu0 %v112
    %710 = vmatprep.subr.mxu0 %v109
    %711 = vmatpush1.msra.mxu0 %v108
    %712 = vmatprep.subr.mxu0 %v105
    %713 = vmatpush1.msra.mxu0 %v104
    %714 = vmatprep.subr.mxu0 %v229
    %715 = vmatpush2.msra.mxu0 %v228
    %716 = vmatprep.subr.mxu0 %v225
    %717 = vmatpush2.msra.mxu0 %v224
    %718 = vmatprep.subr.mxu0 %v221
    %719 = vmatpush2.msra.mxu0 %v220
    %720 = vmatprep.subr.mxu0 %v217
    %721 = vmatpush2.msra.mxu0 %v216
    %722 = vmatprep.subr.mxu0 %v213
    %723 = vmatpush2.msra.mxu0 %v212
    %724 = vmatprep.subr.mxu0 %v209
    %725 = vmatpush2.msra.mxu0 %v208
    %726 = vmatprep.subr.mxu0 %v205
    %727 = vmatpush2.msra.mxu0 %v204
    %728 = vmatprep.subr.mxu0 %v201
    %729 = vmatpush2.msra.mxu0 %v200
    %730 = vmatprep.subr.mxu0 %v197
    %731 = vmatpush2.msra.mxu0 %v196
    %732 = vmatprep.subr.mxu0 %v193
    %733 = vmatpush2.msra.mxu0 %v192
    %734 = vmatprep.subr.mxu0 %v189
    %735 = vmatpush2.msra.mxu0 %v188
    %736 = vmatprep.subr.mxu0 %v185
    %737 = vmatpush2.msra.mxu0 %v184
    %738 = vmatprep.subr.mxu0 %v181
    %739 = vmatpush2.msra.mxu0 %v180
    %740 = vmatprep.subr.mxu0 %v177
    %741 = vmatpush2.msra.mxu0 %v176
    %742 = vmatprep.subr.mxu0 %v173
    %743 = vmatpush2.msra.mxu0 %v172
    %744 = vmatprep.subr.mxu0 %v169
    %745 = vmatpush2.msra.mxu0 %v168
    %746 = vmatprep.mubr.f32.mxu0 %v655
    %747 = vmatmul.mubr.f32.gmra.mxu0 %v647
    %v748 = vpop.f32.mrf.mxu0
    %v749 = vadd.f32 %v621, %v748
    %v750 = vpop.f32.mrf.mxu0
    %v751 = vadd.f32 %v625, %v750
    %752 = vdwg.mxu0
    %753 = vmatprep.subr.mxu0 %v293
    %754 = vmatpush1.msra.mxu0 %v292
    %755 = vmatprep.subr.mxu0 %v289
    %756 = vmatpush1.msra.mxu0 %v288
    %757 = vmatprep.subr.mxu0 %v285
    %758 = vmatpush1.msra.mxu0 %v284
    %759 = vmatprep.subr.mxu0 %v281
    %760 = vmatpush1.msra.mxu0 %v280
    %761 = vmatprep.subr.mxu0 %v277
    %762 = vmatpush1.msra.mxu0 %v276
    %763 = vmatprep.subr.mxu0 %v273
    %764 = vmatpush1.msra.mxu0 %v272
    %765 = vmatprep.subr.mxu0 %v269
    %766 = vmatpush1.msra.mxu0 %v268
    %767 = vmatprep.subr.mxu0 %v265
    %768 = vmatpush1.msra.mxu0 %v264
    %769 = vmatprep.subr.mxu0 %v261
    %770 = vmatpush1.msra.mxu0 %v260
    %771 = vmatprep.subr.mxu0 %v257
    %772 = vmatpush1.msra.mxu0 %v256
    %773 = vmatprep.subr.mxu0 %v253
    %774 = vmatpush1.msra.mxu0 %v252
    %775 = vmatprep.subr.mxu0 %v249
    %776 = vmatpush1.msra.mxu0 %v248
    %777 = vmatprep.subr.mxu0 %v245
    %778 = vmatpush1.msra.mxu0 %v244
    %779 = vmatprep.subr.mxu0 %v241
    %780 = vmatpush1.msra.mxu0 %v240
    %781 = vmatprep.subr.mxu0 %v237
    %782 = vmatpush1.msra.mxu0 %v236
    %783 = vmatprep.subr.mxu0 %v233
    %784 = vmatpush1.msra.mxu0 %v232
    %785 = vmatprep.subr.mxu0 %v357
    %786 = vmatpush2.msra.mxu0 %v356
    %787 = vmatprep.subr.mxu0 %v353
    %788 = vmatpush2.msra.mxu0 %v352
    %789 = vmatprep.subr.mxu0 %v349
    %790 = vmatpush2.msra.mxu0 %v348
    %791 = vmatprep.subr.mxu0 %v345
    %792 = vmatpush2.msra.mxu0 %v344
    %793 = vmatprep.subr.mxu0 %v341
    %794 = vmatpush2.msra.mxu0 %v340
    %795 = vmatprep.subr.mxu0 %v337
    %796 = vmatpush2.msra.mxu0 %v336
    %797 = vmatprep.subr.mxu0 %v333
    %798 = vmatpush2.msra.mxu0 %v332
    %799 = vmatprep.subr.mxu0 %v329
    %800 = vmatpush2.msra.mxu0 %v328
    %801 = vmatprep.subr.mxu0 %v325
    %802 = vmatpush2.msra.mxu0 %v324
    %803 = vmatprep.subr.mxu0 %v321
    %804 = vmatpush2.msra.mxu0 %v320
    %805 = vmatprep.subr.mxu0 %v317
    %806 = vmatpush2.msra.mxu0 %v316
    %807 = vmatprep.subr.mxu0 %v313
    %808 = vmatpush2.msra.mxu0 %v312
    %809 = vmatprep.subr.mxu0 %v309
    %810 = vmatpush2.msra.mxu0 %v308
    %811 = vmatprep.subr.mxu0 %v305
    %812 = vmatpush2.msra.mxu0 %v304
    %813 = vmatprep.subr.mxu0 %v301
    %814 = vmatpush2.msra.mxu0 %v300
    %815 = vmatprep.subr.mxu0 %v297
    %816 = vmatpush2.msra.mxu0 %v296
    %817 = vmatprep.mubr.f32.mxu0 %v656
    %818 = vmatmul.mubr.f32.gmra.mxu0 %v654
    %v819 = vpop.f32.mrf.mxu0
    %v820 = vadd.f32 %v749, %v819
    %v821 = vpop.f32.mrf.mxu0
    %v822 = vadd.f32 %v751, %v821
    %823 = vdwg.mxu0
    %824 = vmatprep.subr.mxu0 %v421
    %825 = vmatpush1.msra.mxu0 %v420
    %826 = vmatprep.subr.mxu0 %v417
    %827 = vmatpush1.msra.mxu0 %v416
    %828 = vmatprep.subr.mxu0 %v413
    %829 = vmatpush1.msra.mxu0 %v412
    %830 = vmatprep.subr.mxu0 %v409
    %831 = vmatpush1.msra.mxu0 %v408
    %832 = vmatprep.subr.mxu0 %v405
    %833 = vmatpush1.msra.mxu0 %v404
    %834 = vmatprep.subr.mxu0 %v401
    %835 = vmatpush1.msra.mxu0 %v400
    %836 = vmatprep.subr.mxu0 %v397
    %837 = vmatpush1.msra.mxu0 %v396
    %838 = vmatprep.subr.mxu0 %v393
    %839 = vmatpush1.msra.mxu0 %v392
    %840 = vmatprep.subr.mxu0 %v389
    %841 = vmatpush1.msra.mxu0 %v388
    %842 = vmatprep.subr.mxu0 %v385
    %843 = vmatpush1.msra.mxu0 %v384
    %844 = vmatprep.subr.mxu0 %v381
    %845 = vmatpush1.msra.mxu0 %v380
    %846 = vmatprep.subr.mxu0 %v377
    %847 = vmatpush1.msra.mxu0 %v376
    %848 = vmatprep.subr.mxu0 %v373
    %849 = vmatpush1.msra.mxu0 %v372
    %850 = vmatprep.subr.mxu0 %v369
    %851 = vmatpush1.msra.mxu0 %v368
    %852 = vmatprep.subr.mxu0 %v365
    %853 = vmatpush1.msra.mxu0 %v364
    %854 = vmatprep.subr.mxu0 %v361
    %855 = vmatpush1.msra.mxu0 %v360
    %856 = vmatprep.subr.mxu0 %v485
    %857 = vmatpush2.msra.mxu0 %v484
    %858 = vmatprep.subr.mxu0 %v481
    %859 = vmatpush2.msra.mxu0 %v480
    %860 = vmatprep.subr.mxu0 %v477
    %861 = vmatpush2.msra.mxu0 %v476
    %862 = vmatprep.subr.mxu0 %v473
    %863 = vmatpush2.msra.mxu0 %v472
    %864 = vmatprep.subr.mxu0 %v469
    %865 = vmatpush2.msra.mxu0 %v468
    %866 = vmatprep.subr.mxu0 %v465
    %867 = vmatpush2.msra.mxu0 %v464
    %868 = vmatprep.subr.mxu0 %v461
    %869 = vmatpush2.msra.mxu0 %v460
    %870 = vmatprep.subr.mxu0 %v457
    %871 = vmatpush2.msra.mxu0 %v456
    %872 = vmatprep.subr.mxu0 %v453
    %873 = vmatpush2.msra.mxu0 %v452
    %874 = vmatprep.subr.mxu0 %v449
    %875 = vmatpush2.msra.mxu0 %v448
    %876 = vmatprep.subr.mxu0 %v445
    %877 = vmatpush2.msra.mxu0 %v444
    %878 = vmatprep.subr.mxu0 %v441
    %879 = vmatpush2.msra.mxu0 %v440
    %880 = vmatprep.subr.mxu0 %v437
    %881 = vmatpush2.msra.mxu0 %v436
    %882 = vmatprep.subr.mxu0 %v433
    %883 = vmatpush2.msra.mxu0 %v432
    %884 = vmatprep.subr.mxu0 %v429
    %885 = vmatpush2.msra.mxu0 %v428
    %886 = vmatprep.subr.mxu0 %v425
    %887 = vmatpush2.msra.mxu0 %v424
    %888 = vmatprep.mubr.f32.mxu0 %v672
    %889 = vmatmul.mubr.f32.gmra.mxu0 %v664
    %v890 = vpop.f32.mrf.mxu0
    %v891 = vadd.f32 %v820, %v890
    %v892 = vpop.f32.mrf.mxu0
    %v893 = vadd.f32 %v822, %v892
    %894 = vdwg.mxu0
    %895 = vmatprep.subr.mxu0 %v549
    %896 = vmatpush1.msra.mxu0 %v548
    %897 = vmatprep.subr.mxu0 %v545
    %898 = vmatpush1.msra.mxu0 %v544
    %899 = vmatprep.subr.mxu0 %v541
    %900 = vmatpush1.msra.mxu0 %v540
    %901 = vmatprep.subr.mxu0 %v537
    %902 = vmatpush1.msra.mxu0 %v536
    %903 = vmatprep.subr.mxu0 %v533
    %904 = vmatpush1.msra.mxu0 %v532
    %905 = vmatprep.subr.mxu0 %v529
    %906 = vmatpush1.msra.mxu0 %v528
    %907 = vmatprep.subr.mxu0 %v525
    %908 = vmatpush1.msra.mxu0 %v524
    %909 = vmatprep.subr.mxu0 %v521
    %910 = vmatpush1.msra.mxu0 %v520
    %911 = vmatprep.subr.mxu0 %v517
    %912 = vmatpush1.msra.mxu0 %v516
    %913 = vmatprep.subr.mxu0 %v513
    %914 = vmatpush1.msra.mxu0 %v512
    %915 = vmatprep.subr.mxu0 %v509
    %916 = vmatpush1.msra.mxu0 %v508
    %917 = vmatprep.subr.mxu0 %v505
    %918 = vmatpush1.msra.mxu0 %v504
    %919 = vmatprep.subr.mxu0 %v501
    %920 = vmatpush1.msra.mxu0 %v500
    %921 = vmatprep.subr.mxu0 %v497
    %922 = vmatpush1.msra.mxu0 %v496
    %923 = vmatprep.subr.mxu0 %v493
    %924 = vmatpush1.msra.mxu0 %v492
    %925 = vmatprep.subr.mxu0 %v489
    %926 = vmatpush1.msra.mxu0 %v488
    %927 = vmatprep.subr.mxu0 %v613
    %928 = vmatpush2.msra.mxu0 %v612
    %929 = vmatprep.subr.mxu0 %v609
    %930 = vmatpush2.msra.mxu0 %v608
    %931 = vmatprep.subr.mxu0 %v605
    %932 = vmatpush2.msra.mxu0 %v604
    %933 = vmatprep.subr.mxu0 %v601
    %934 = vmatpush2.msra.mxu0 %v600
    %935 = vmatprep.subr.mxu0 %v597
    %936 = vmatpush2.msra.mxu0 %v596
    %937 = vmatprep.subr.mxu0 %v593
    %938 = vmatpush2.msra.mxu0 %v592
    %939 = vmatprep.subr.mxu0 %v589
    %940 = vmatpush2.msra.mxu0 %v588
    %941 = vmatprep.subr.mxu0 %v585
    %942 = vmatpush2.msra.mxu0 %v584
    %943 = vmatprep.subr.mxu0 %v581
    %944 = vmatpush2.msra.mxu0 %v580
    %945 = vmatprep.subr.mxu0 %v577
    %946 = vmatpush2.msra.mxu0 %v576
    %947 = vmatprep.subr.mxu0 %v573
    %948 = vmatpush2.msra.mxu0 %v572
    %949 = vmatprep.subr.mxu0 %v569
    %950 = vmatpush2.msra.mxu0 %v568
    %951 = vmatprep.subr.mxu0 %v565
    %952 = vmatpush2.msra.mxu0 %v564
    %953 = vmatprep.subr.mxu0 %v561
    %954 = vmatpush2.msra.mxu0 %v560
    %955 = vmatprep.subr.mxu0 %v557
    %956 = vmatpush2.msra.mxu0 %v556
    %957 = vmatprep.subr.mxu0 %v553
    %958 = vmatpush2.msra.mxu0 %v552
    %959 = vmatprep.mubr.f32.mxu0 %v673
    %960 = vmatmul.mubr.f32.gmra.mxu0 %v671
    %v961 = vpop.f32.mrf.mxu0
    %v962 = vadd.f32 %v891, %v961
    %v963 = vpop.f32.mrf.mxu0
    %v964 = vadd.f32 %v893, %v963
    %965 = vdwg.mxu0
    %966 = vmatprep.subr.mxu0 %v167
    %967 = vmatpush1.msra.mxu0 %v166
    %968 = vmatprep.subr.mxu0 %v163
    %969 = vmatpush1.msra.mxu0 %v162
    %970 = vmatprep.subr.mxu0 %v159
    %971 = vmatpush1.msra.mxu0 %v158
    %972 = vmatprep.subr.mxu0 %v155
    %973 = vmatpush1.msra.mxu0 %v154
    %974 = vmatprep.subr.mxu0 %v151
    %975 = vmatpush1.msra.mxu0 %v150
    %976 = vmatprep.subr.mxu0 %v147
    %977 = vmatpush1.msra.mxu0 %v146
    %978 = vmatprep.subr.mxu0 %v143
    %979 = vmatpush1.msra.mxu0 %v142
    %980 = vmatprep.subr.mxu0 %v139
    %981 = vmatpush1.msra.mxu0 %v138
    %982 = vmatprep.subr.mxu0 %v135
    %983 = vmatpush1.msra.mxu0 %v134
    %984 = vmatprep.subr.mxu0 %v131
    %985 = vmatpush1.msra.mxu0 %v130
    %986 = vmatprep.subr.mxu0 %v127
    %987 = vmatpush1.msra.mxu0 %v126
    %988 = vmatprep.subr.mxu0 %v123
    %989 = vmatpush1.msra.mxu0 %v122
    %990 = vmatprep.subr.mxu0 %v119
    %991 = vmatpush1.msra.mxu0 %v118
    %992 = vmatprep.subr.mxu0 %v115
    %993 = vmatpush1.msra.mxu0 %v114
    %994 = vmatprep.subr.mxu0 %v111
    %995 = vmatpush1.msra.mxu0 %v110
    %996 = vmatprep.subr.mxu0 %v107
    %997 = vmatpush1.msra.mxu0 %v106
    %998 = vmatprep.subr.mxu0 %v231
    %999 = vmatpush2.msra.mxu0 %v230
    %1000 = vmatprep.subr.mxu0 %v227
    %1001 = vmatpush2.msra.mxu0 %v226
    %1002 = vmatprep.subr.mxu0 %v223
    %1003 = vmatpush2.msra.mxu0 %v222
    %1004 = vmatprep.subr.mxu0 %v219
    %1005 = vmatpush2.msra.mxu0 %v218
    %1006 = vmatprep.subr.mxu0 %v215
    %1007 = vmatpush2.msra.mxu0 %v214
    %1008 = vmatprep.subr.mxu0 %v211
    %1009 = vmatpush2.msra.mxu0 %v210
    %1010 = vmatprep.subr.mxu0 %v207
    %1011 = vmatpush2.msra.mxu0 %v206
    %1012 = vmatprep.subr.mxu0 %v203
    %1013 = vmatpush2.msra.mxu0 %v202
    %1014 = vmatprep.subr.mxu0 %v199
    %1015 = vmatpush2.msra.mxu0 %v198
    %1016 = vmatprep.subr.mxu0 %v195
    %1017 = vmatpush2.msra.mxu0 %v194
    %1018 = vmatprep.subr.mxu0 %v191
    %1019 = vmatpush2.msra.mxu0 %v190
    %1020 = vmatprep.subr.mxu0 %v187
    %1021 = vmatpush2.msra.mxu0 %v186
    %1022 = vmatprep.subr.mxu0 %v183
    %1023 = vmatpush2.msra.mxu0 %v182
    %1024 = vmatprep.subr.mxu0 %v179
    %1025 = vmatpush2.msra.mxu0 %v178
    %1026 = vmatprep.subr.mxu0 %v175
    %1027 = vmatpush2.msra.mxu0 %v174
    %1028 = vmatprep.subr.mxu0 %v171
    %1029 = vmatpush2.msra.mxu0 %v170
    %1030 = vmatprep.mubr.f32.mxu0 %v655
    %1031 = vmatmul.mubr.f32.gmra.mxu0 %v647
    %v1032 = vpop.f32.mrf.mxu0
    %v1033 = vadd.f32 %v629, %v1032
    %v1034 = vpop.f32.mrf.mxu0
    %v1035 = vadd.f32 %v633, %v1034
    %1036 = vdwg.mxu0
    %1037 = vmatprep.subr.mxu0 %v295
    %1038 = vmatpush1.msra.mxu0 %v294
    %1039 = vmatprep.subr.mxu0 %v291
    %1040 = vmatpush1.msra.mxu0 %v290
    %1041 = vmatprep.subr.mxu0 %v287
    %1042 = vmatpush1.msra.mxu0 %v286
    %1043 = vmatprep.subr.mxu0 %v283
    %1044 = vmatpush1.msra.mxu0 %v282
    %1045 = vmatprep.subr.mxu0 %v279
    %1046 = vmatpush1.msra.mxu0 %v278
    %1047 = vmatprep.subr.mxu0 %v275
    %1048 = vmatpush1.msra.mxu0 %v274
    %1049 = vmatprep.subr.mxu0 %v271
    %1050 = vmatpush1.msra.mxu0 %v270
    %1051 = vmatprep.subr.mxu0 %v267
    %1052 = vmatpush1.msra.mxu0 %v266
    %1053 = vmatprep.subr.mxu0 %v263
    %1054 = vmatpush1.msra.mxu0 %v262
    %1055 = vmatprep.subr.mxu0 %v259
    %1056 = vmatpush1.msra.mxu0 %v258
    %1057 = vmatprep.subr.mxu0 %v255
    %1058 = vmatpush1.msra.mxu0 %v254
    %1059 = vmatprep.subr.mxu0 %v251
    %1060 = vmatpush1.msra.mxu0 %v250
    %1061 = vmatprep.subr.mxu0 %v247
    %1062 = vmatpush1.msra.mxu0 %v246
    %1063 = vmatprep.subr.mxu0 %v243
    %1064 = vmatpush1.msra.mxu0 %v242
    %1065 = vmatprep.subr.mxu0 %v239
    %1066 = vmatpush1.msra.mxu0 %v238
    %1067 = vmatprep.subr.mxu0 %v235
    %1068 = vmatpush1.msra.mxu0 %v234
    %1069 = vmatprep.subr.mxu0 %v359
    %1070 = vmatpush2.msra.mxu0 %v358
    %1071 = vmatprep.subr.mxu0 %v355
    %1072 = vmatpush2.msra.mxu0 %v354
    %1073 = vmatprep.subr.mxu0 %v351
    %1074 = vmatpush2.msra.mxu0 %v350
    %1075 = vmatprep.subr.mxu0 %v347
    %1076 = vmatpush2.msra.mxu0 %v346
    %1077 = vmatprep.subr.mxu0 %v343
    %1078 = vmatpush2.msra.mxu0 %v342
    %1079 = vmatprep.subr.mxu0 %v339
    %1080 = vmatpush2.msra.mxu0 %v338
    %1081 = vmatprep.subr.mxu0 %v335
    %1082 = vmatpush2.msra.mxu0 %v334
    %1083 = vmatprep.subr.mxu0 %v331
    %1084 = vmatpush2.msra.mxu0 %v330
    %1085 = vmatprep.subr.mxu0 %v327
    %1086 = vmatpush2.msra.mxu0 %v326
    %1087 = vmatprep.subr.mxu0 %v323
    %1088 = vmatpush2.msra.mxu0 %v322
    %1089 = vmatprep.subr.mxu0 %v319
    %1090 = vmatpush2.msra.mxu0 %v318
    %1091 = vmatprep.subr.mxu0 %v315
    %1092 = vmatpush2.msra.mxu0 %v314
    %1093 = vmatprep.subr.mxu0 %v311
    %1094 = vmatpush2.msra.mxu0 %v310
    %1095 = vmatprep.subr.mxu0 %v307
    %1096 = vmatpush2.msra.mxu0 %v306
    %1097 = vmatprep.subr.mxu0 %v303
    %1098 = vmatpush2.msra.mxu0 %v302
    %1099 = vmatprep.subr.mxu0 %v299
    %1100 = vmatpush2.msra.mxu0 %v298
    %1101 = vmatprep.mubr.f32.mxu0 %v656
    %1102 = vmatmul.mubr.f32.gmra.mxu0 %v654
    %v1103 = vpop.f32.mrf.mxu0
    %v1104 = vadd.f32 %v1033, %v1103
    %v1105 = vpop.f32.mrf.mxu0
    %v1106 = vadd.f32 %v1035, %v1105
    %1107 = vdwg.mxu0
    %1108 = vmatprep.subr.mxu0 %v423
    %1109 = vmatpush1.msra.mxu0 %v422
    %1110 = vmatprep.subr.mxu0 %v419
    %1111 = vmatpush1.msra.mxu0 %v418
    %1112 = vmatprep.subr.mxu0 %v415
    %1113 = vmatpush1.msra.mxu0 %v414
    %1114 = vmatprep.subr.mxu0 %v411
    %1115 = vmatpush1.msra.mxu0 %v410
    %1116 = vmatprep.subr.mxu0 %v407
    %1117 = vmatpush1.msra.mxu0 %v406
    %1118 = vmatprep.subr.mxu0 %v403
    %1119 = vmatpush1.msra.mxu0 %v402
    %1120 = vmatprep.subr.mxu0 %v399
    %1121 = vmatpush1.msra.mxu0 %v398
    %1122 = vmatprep.subr.mxu0 %v395
    %1123 = vmatpush1.msra.mxu0 %v394
    %1124 = vmatprep.subr.mxu0 %v391
    %1125 = vmatpush1.msra.mxu0 %v390
    %1126 = vmatprep.subr.mxu0 %v387
    %1127 = vmatpush1.msra.mxu0 %v386
    %1128 = vmatprep.subr.mxu0 %v383
    %1129 = vmatpush1.msra.mxu0 %v382
    %1130 = vmatprep.subr.mxu0 %v379
    %1131 = vmatpush1.msra.mxu0 %v378
    %1132 = vmatprep.subr.mxu0 %v375
    %1133 = vmatpush1.msra.mxu0 %v374
    %1134 = vmatprep.subr.mxu0 %v371
    %1135 = vmatpush1.msra.mxu0 %v370
    %1136 = vmatprep.subr.mxu0 %v367
    %1137 = vmatpush1.msra.mxu0 %v366
    %1138 = vmatprep.subr.mxu0 %v363
    %1139 = vmatpush1.msra.mxu0 %v362
    %1140 = vmatprep.subr.mxu0 %v487
    %1141 = vmatpush2.msra.mxu0 %v486
    %1142 = vmatprep.subr.mxu0 %v483
    %1143 = vmatpush2.msra.mxu0 %v482
    %1144 = vmatprep.subr.mxu0 %v479
    %1145 = vmatpush2.msra.mxu0 %v478
    %1146 = vmatprep.subr.mxu0 %v475
    %1147 = vmatpush2.msra.mxu0 %v474
    %1148 = vmatprep.subr.mxu0 %v471
    %1149 = vmatpush2.msra.mxu0 %v470
    %1150 = vmatprep.subr.mxu0 %v467
    %1151 = vmatpush2.msra.mxu0 %v466
    %1152 = vmatprep.subr.mxu0 %v463
    %1153 = vmatpush2.msra.mxu0 %v462
    %1154 = vmatprep.subr.mxu0 %v459
    %1155 = vmatpush2.msra.mxu0 %v458
    %1156 = vmatprep.subr.mxu0 %v455
    %1157 = vmatpush2.msra.mxu0 %v454
    %1158 = vmatprep.subr.mxu0 %v451
    %1159 = vmatpush2.msra.mxu0 %v450
    %1160 = vmatprep.subr.mxu0 %v447
    %1161 = vmatpush2.msra.mxu0 %v446
    %1162 = vmatprep.subr.mxu0 %v443
    %1163 = vmatpush2.msra.mxu0 %v442
    %1164 = vmatprep.subr.mxu0 %v439
    %1165 = vmatpush2.msra.mxu0 %v438
    %1166 = vmatprep.subr.mxu0 %v435
    %1167 = vmatpush2.msra.mxu0 %v434
    %1168 = vmatprep.subr.mxu0 %v431
    %1169 = vmatpush2.msra.mxu0 %v430
    %1170 = vmatprep.subr.mxu0 %v427
    %1171 = vmatpush2.msra.mxu0 %v426
    %1172 = vmatprep.mubr.f32.mxu0 %v672
    %1173 = vmatmul.mubr.f32.gmra.mxu0 %v664
    %v1174 = vpop.f32.mrf.mxu0
    %v1175 = vadd.f32 %v1104, %v1174
    %v1176 = vpop.f32.mrf.mxu0
    %v1177 = vadd.f32 %v1106, %v1176
    %1178 = vdwg.mxu0
    %1179 = vmatprep.subr.mxu0 %v551
    %1180 = vmatpush1.msra.mxu0 %v550
    %1181 = vmatprep.subr.mxu0 %v547
    %1182 = vmatpush1.msra.mxu0 %v546
    %1183 = vmatprep.subr.mxu0 %v543
    %1184 = vmatpush1.msra.mxu0 %v542
    %1185 = vmatprep.subr.mxu0 %v539
    %1186 = vmatpush1.msra.mxu0 %v538
    %1187 = vmatprep.subr.mxu0 %v535
    %1188 = vmatpush1.msra.mxu0 %v534
    %1189 = vmatprep.subr.mxu0 %v531
    %1190 = vmatpush1.msra.mxu0 %v530
    %1191 = vmatprep.subr.mxu0 %v527
    %1192 = vmatpush1.msra.mxu0 %v526
    %1193 = vmatprep.subr.mxu0 %v523
    %1194 = vmatpush1.msra.mxu0 %v522
    %1195 = vmatprep.subr.mxu0 %v519
    %1196 = vmatpush1.msra.mxu0 %v518
    %1197 = vmatprep.subr.mxu0 %v515
    %1198 = vmatpush1.msra.mxu0 %v514
    %1199 = vmatprep.subr.mxu0 %v511
    %1200 = vmatpush1.msra.mxu0 %v510
    %1201 = vmatprep.subr.mxu0 %v507
    %1202 = vmatpush1.msra.mxu0 %v506
    %1203 = vmatprep.subr.mxu0 %v503
    %1204 = vmatpush1.msra.mxu0 %v502
    %1205 = vmatprep.subr.mxu0 %v499
    %1206 = vmatpush1.msra.mxu0 %v498
    %1207 = vmatprep.subr.mxu0 %v495
    %1208 = vmatpush1.msra.mxu0 %v494
    %1209 = vmatprep.subr.mxu0 %v491
    %1210 = vmatpush1.msra.mxu0 %v490
    %1211 = vmatprep.subr.mxu0 %v615
    %1212 = vmatpush2.msra.mxu0 %v614
    %1213 = vmatprep.subr.mxu0 %v611
    %1214 = vmatpush2.msra.mxu0 %v610
    %1215 = vmatprep.subr.mxu0 %v607
    %1216 = vmatpush2.msra.mxu0 %v606
    %1217 = vmatprep.subr.mxu0 %v603
    %1218 = vmatpush2.msra.mxu0 %v602
    %1219 = vmatprep.subr.mxu0 %v599
    %1220 = vmatpush2.msra.mxu0 %v598
    %1221 = vmatprep.subr.mxu0 %v595
    %1222 = vmatpush2.msra.mxu0 %v594
    %1223 = vmatprep.subr.mxu0 %v591
    %1224 = vmatpush2.msra.mxu0 %v590
    %1225 = vmatprep.subr.mxu0 %v587
    %1226 = vmatpush2.msra.mxu0 %v586
    %1227 = vmatprep.subr.mxu0 %v583
    %1228 = vmatpush2.msra.mxu0 %v582
    %1229 = vmatprep.subr.mxu0 %v579
    %1230 = vmatpush2.msra.mxu0 %v578
    %1231 = vmatprep.subr.mxu0 %v575
    %1232 = vmatpush2.msra.mxu0 %v574
    %1233 = vmatprep.subr.mxu0 %v571
    %1234 = vmatpush2.msra.mxu0 %v570
    %1235 = vmatprep.subr.mxu0 %v567
    %1236 = vmatpush2.msra.mxu0 %v566
    %1237 = vmatprep.subr.mxu0 %v563
    %1238 = vmatpush2.msra.mxu0 %v562
    %1239 = vmatprep.subr.mxu0 %v559
    %1240 = vmatpush2.msra.mxu0 %v558
    %1241 = vmatprep.subr.mxu0 %v555
    %1242 = vmatpush2.msra.mxu0 %v554
    %1243 = vmatprep.mubr.f32.mxu0 %v673
    %1244 = vmatmul.mubr.f32.gmra.mxu0 %v671
    %v1245 = vpop.f32.mrf.mxu0
    %v1246 = vadd.f32 %v1175, %v1245
    %v1247 = vpop.f32.mrf.mxu0
    %v1248 = vadd.f32 %v1177, %v1247
    %1249 = vdwg.mxu0
    %v1250 = vmax.f32 %v962, 0.0
    %v1251 = vmax.f32 %v964, 0.0
    %v1252 = vmax.f32 %v1246, 0.0
    %v1253 = vmax.f32 %v1248, 0.0
    %v1254 = vld [vmem:[#allocation6] sm:$0xff]
    %v1255 = vld [vmem:[#allocation6 + $0x8] sm:$0xff]
    %v1256 = vld [vmem:[#allocation6 + $0x10] sm:$0xff]
    %v1257 = vld [vmem:[#allocation6 + $0x18] sm:$0xff]
    %v1258 = vld [vmem:[#allocation6 + $0x20] sm:$0xff]
    %v1259 = vld [vmem:[#allocation6 + $0x28] sm:$0xff]
    %v1260 = vld [vmem:[#allocation6 + $0x30] sm:$0xff]
    %v1261 = vld [vmem:[#allocation6 + $0x38] sm:$0xff]
    %v1262 = vld [vmem:[#allocation6 + $0x40] sm:$0xff]
    %v1263 = vld [vmem:[#allocation6 + $0x48] sm:$0xff]
    %v1264 = vld [vmem:[#allocation6 + $0x50] sm:$0xff]
    %v1265 = vld [vmem:[#allocation6 + $0x58] sm:$0xff]
    %v1266 = vld [vmem:[#allocation6 + $0x60] sm:$0xff]
    %v1267 = vld [vmem:[#allocation6 + $0x68] sm:$0xff]
    %v1268 = vld [vmem:[#allocation6 + $0x70] sm:$0xff]
    %v1269 = vld [vmem:[#allocation6 + $0x78] sm:$0xff]
    %v1270 = vld [vmem:[#allocation6 + $0x80] sm:$0xff]
    %v1271 = vld [vmem:[#allocation6 + $0x88] sm:$0xff]
    %v1272 = vld [vmem:[#allocation6 + $0x90] sm:$0xff]
    %v1273 = vld [vmem:[#allocation6 + $0x98] sm:$0xff]
    %v1274 = vld [vmem:[#allocation6 + $0xa0] sm:$0xff]
    %v1275 = vld [vmem:[#allocation6 + $0xa8] sm:$0xff]
    %v1276 = vld [vmem:[#allocation6 + $0xb0] sm:$0xff]
    %v1277 = vld [vmem:[#allocation6 + $0xb8] sm:$0xff]
    %v1278 = vld [vmem:[#allocation6 + $0xc0] sm:$0xff]
    %v1279 = vld [vmem:[#allocation6 + $0xc8] sm:$0xff]
    %v1280 = vld [vmem:[#allocation6 + $0xd0] sm:$0xff]
    %v1281 = vld [vmem:[#allocation6 + $0xd8] sm:$0xff]
    %v1282 = vld [vmem:[#allocation6 + $0xe0] sm:$0xff]
    %v1283 = vld [vmem:[#allocation6 + $0xe8] sm:$0xff]
    %v1284 = vld [vmem:[#allocation6 + $0xf0] sm:$0xff]
    %v1285 = vld [vmem:[#allocation6 + $0xf8] sm:$0xff]
    %v1286 = vld [vmem:[#allocation6 + $0x100] sm:$0xff]
    %v1287 = vld [vmem:[#allocation6 + $0x108] sm:$0xff]
    %v1288 = vld [vmem:[#allocation6 + $0x110] sm:$0xff]
    %v1289 = vld [vmem:[#allocation6 + $0x118] sm:$0xff]
    %v1290 = vld [vmem:[#allocation6 + $0x120] sm:$0xff]
    %v1291 = vld [vmem:[#allocation6 + $0x128] sm:$0xff]
    %v1292 = vld [vmem:[#allocation6 + $0x130] sm:$0xff]
    %v1293 = vld [vmem:[#allocation6 + $0x138] sm:$0xff]
    %v1294 = vld [vmem:[#allocation6 + $0x140] sm:$0xff]
    %v1295 = vld [vmem:[#allocation6 + $0x148] sm:$0xff]
    %v1296 = vld [vmem:[#allocation6 + $0x150] sm:$0xff]
    %v1297 = vld [vmem:[#allocation6 + $0x158] sm:$0xff]
    %v1298 = vld [vmem:[#allocation6 + $0x160] sm:$0xff]
    %v1299 = vld [vmem:[#allocation6 + $0x168] sm:$0xff]
    %v1300 = vld [vmem:[#allocation6 + $0x170] sm:$0xff]
    %v1301 = vld [vmem:[#allocation6 + $0x178] sm:$0xff]
    %v1302 = vld [vmem:[#allocation6 + $0x180] sm:$0xff]
    %v1303 = vld [vmem:[#allocation6 + $0x188] sm:$0xff]
    %v1304 = vld [vmem:[#allocation6 + $0x190] sm:$0xff]
    %v1305 = vld [vmem:[#allocation6 + $0x198] sm:$0xff]
    %v1306 = vld [vmem:[#allocation6 + $0x1a0] sm:$0xff]
    %v1307 = vld [vmem:[#allocation6 + $0x1a8] sm:$0xff]
    %v1308 = vld [vmem:[#allocation6 + $0x1b0] sm:$0xff]
    %v1309 = vld [vmem:[#allocation6 + $0x1b8] sm:$0xff]
    %v1310 = vld [vmem:[#allocation6 + $0x1c0] sm:$0xff]
    %v1311 = vld [vmem:[#allocation6 + $0x1c8] sm:$0xff]
    %v1312 = vld [vmem:[#allocation6 + $0x1d0] sm:$0xff]
    %v1313 = vld [vmem:[#allocation6 + $0x1d8] sm:$0xff]
    %v1314 = vld [vmem:[#allocation6 + $0x1e0] sm:$0xff]
    %v1315 = vld [vmem:[#allocation6 + $0x1e8] sm:$0xff]
    %v1316 = vld [vmem:[#allocation6 + $0x1f0] sm:$0xff]
    %v1317 = vld [vmem:[#allocation6 + $0x1f8] sm:$0xff]
    %v1318 = vld [vmem:[#allocation6 + $0x200] sm:$0xff]
    %v1319 = vld [vmem:[#allocation6 + $0x208] sm:$0xff]
    %v1320 = vld [vmem:[#allocation6 + $0x210] sm:$0xff]
    %v1321 = vld [vmem:[#allocation6 + $0x218] sm:$0xff]
    %v1322 = vld [vmem:[#allocation6 + $0x220] sm:$0xff]
    %v1323 = vld [vmem:[#allocation6 + $0x228] sm:$0xff]
    %v1324 = vld [vmem:[#allocation6 + $0x230] sm:$0xff]
    %v1325 = vld [vmem:[#allocation6 + $0x238] sm:$0xff]
    %v1326 = vld [vmem:[#allocation6 + $0x240] sm:$0xff]
    %v1327 = vld [vmem:[#allocation6 + $0x248] sm:$0xff]
    %v1328 = vld [vmem:[#allocation6 + $0x250] sm:$0xff]
    %v1329 = vld [vmem:[#allocation6 + $0x258] sm:$0xff]
    %v1330 = vld [vmem:[#allocation6 + $0x260] sm:$0xff]
    %v1331 = vld [vmem:[#allocation6 + $0x268] sm:$0xff]
    %v1332 = vld [vmem:[#allocation6 + $0x270] sm:$0xff]
    %v1333 = vld [vmem:[#allocation6 + $0x278] sm:$0xff]
    %v1334 = vld [vmem:[#allocation6 + $0x280] sm:$0xff]
    %v1335 = vld [vmem:[#allocation6 + $0x288] sm:$0xff]
    %v1336 = vld [vmem:[#allocation6 + $0x290] sm:$0xff]
    %v1337 = vld [vmem:[#allocation6 + $0x298] sm:$0xff]
    %v1338 = vld [vmem:[#allocation6 + $0x2a0] sm:$0xff]
    %v1339 = vld [vmem:[#allocation6 + $0x2a8] sm:$0xff]
    %v1340 = vld [vmem:[#allocation6 + $0x2b0] sm:$0xff]
    %v1341 = vld [vmem:[#allocation6 + $0x2b8] sm:$0xff]
    %v1342 = vld [vmem:[#allocation6 + $0x2c0] sm:$0xff]
    %v1343 = vld [vmem:[#allocation6 + $0x2c8] sm:$0xff]
    %v1344 = vld [vmem:[#allocation6 + $0x2d0] sm:$0xff]
    %v1345 = vld [vmem:[#allocation6 + $0x2d8] sm:$0xff]
    %v1346 = vld [vmem:[#allocation6 + $0x2e0] sm:$0xff]
    %v1347 = vld [vmem:[#allocation6 + $0x2e8] sm:$0xff]
    %v1348 = vld [vmem:[#allocation6 + $0x2f0] sm:$0xff]
    %v1349 = vld [vmem:[#allocation6 + $0x2f8] sm:$0xff]
    %v1350 = vld [vmem:[#allocation6 + $0x300] sm:$0xff]
    %v1351 = vld [vmem:[#allocation6 + $0x308] sm:$0xff]
    %v1352 = vld [vmem:[#allocation6 + $0x310] sm:$0xff]
    %v1353 = vld [vmem:[#allocation6 + $0x318] sm:$0xff]
    %v1354 = vld [vmem:[#allocation6 + $0x320] sm:$0xff]
    %v1355 = vld [vmem:[#allocation6 + $0x328] sm:$0xff]
    %v1356 = vld [vmem:[#allocation6 + $0x330] sm:$0xff]
    %v1357 = vld [vmem:[#allocation6 + $0x338] sm:$0xff]
    %v1358 = vld [vmem:[#allocation6 + $0x340] sm:$0xff]
    %v1359 = vld [vmem:[#allocation6 + $0x348] sm:$0xff]
    %v1360 = vld [vmem:[#allocation6 + $0x350] sm:$0xff]
    %v1361 = vld [vmem:[#allocation6 + $0x358] sm:$0xff]
    %v1362 = vld [vmem:[#allocation6 + $0x360] sm:$0xff]
    %v1363 = vld [vmem:[#allocation6 + $0x368] sm:$0xff]
    %v1364 = vld [vmem:[#allocation6 + $0x370] sm:$0xff]
    %v1365 = vld [vmem:[#allocation6 + $0x378] sm:$0xff]
    %v1366 = vld [vmem:[#allocation6 + $0x380] sm:$0xff]
    %v1367 = vld [vmem:[#allocation6 + $0x388] sm:$0xff]
    %v1368 = vld [vmem:[#allocation6 + $0x390] sm:$0xff]
    %v1369 = vld [vmem:[#allocation6 + $0x398] sm:$0xff]
    %v1370 = vld [vmem:[#allocation6 + $0x3a0] sm:$0xff]
    %v1371 = vld [vmem:[#allocation6 + $0x3a8] sm:$0xff]
    %v1372 = vld [vmem:[#allocation6 + $0x3b0] sm:$0xff]
    %v1373 = vld [vmem:[#allocation6 + $0x3b8] sm:$0xff]
    %v1374 = vld [vmem:[#allocation6 + $0x3c0] sm:$0xff]
    %v1375 = vld [vmem:[#allocation6 + $0x3c8] sm:$0xff]
    %v1376 = vld [vmem:[#allocation6 + $0x3d0] sm:$0xff]
    %v1377 = vld [vmem:[#allocation6 + $0x3d8] sm:$0xff]
    %v1378 = vld [vmem:[#allocation6 + $0x3e0] sm:$0xff]
    %v1379 = vld [vmem:[#allocation6 + $0x3e8] sm:$0xff]
    %v1380 = vld [vmem:[#allocation6 + $0x3f0] sm:$0xff]
    %v1381 = vld [vmem:[#allocation6 + $0x3f8] sm:$0xff]
    %v1382 = vld [vmem:[#allocation7] sm:$0x3]
    %v1384 = vlaneseq
    %v1385 = vshrl.u32 %v1384, 7
    %v1386 = vsub.s32 0, %v1385
    %v1387 = vrot.slane %v1382, %v1386
    %v1388 = vlaneseq
    %v1389 = vshrl.u32 %v1388, 7
    %v1390 = vsub.s32 1, %v1389
    %v1391 = vrot.slane %v1382, %v1390
    %1394 = vmatprep.subr.mxu0 %v1285
    %1395 = vmatpush1.msra.mxu0 %v1284
    %1396 = vmatprep.subr.mxu0 %v1283
    %1397 = vmatpush1.msra.mxu0 %v1282
    %1398 = vmatprep.subr.mxu0 %v1281
    %1399 = vmatpush1.msra.mxu0 %v1280
    %1400 = vmatprep.subr.mxu0 %v1279
    %1401 = vmatpush1.msra.mxu0 %v1278
    %1402 = vmatprep.subr.mxu0 %v1277
    %1403 = vmatpush1.msra.mxu0 %v1276
    %1404 = vmatprep.subr.mxu0 %v1275
    %1405 = vmatpush1.msra.mxu0 %v1274
    %1406 = vmatprep.subr.mxu0 %v1273
    %1407 = vmatpush1.msra.mxu0 %v1272
    %1408 = vmatprep.subr.mxu0 %v1271
    %1409 = vmatpush1.msra.mxu0 %v1270
    %1410 = vmatprep.subr.mxu0 %v1269
    %1411 = vmatpush1.msra.mxu0 %v1268
    %1412 = vmatprep.subr.mxu0 %v1267
    %1413 = vmatpush1.msra.mxu0 %v1266
    %1414 = vmatprep.subr.mxu0 %v1265
    %1415 = vmatpush1.msra.mxu0 %v1264
    %1416 = vmatprep.subr.mxu0 %v1263
    %1417 = vmatpush1.msra.mxu0 %v1262
    %1418 = vmatprep.subr.mxu0 %v1261
    %1419 = vmatpush1.msra.mxu0 %v1260
    %1420 = vmatprep.subr.mxu0 %v1259
    %1421 = vmatpush1.msra.mxu0 %v1258
    %1422 = vmatprep.subr.mxu0 %v1257
    %1423 = vmatpush1.msra.mxu0 %v1256
    %1424 = vmatprep.subr.mxu0 %v1255
    %1425 = vmatpush1.msra.mxu0 %v1254
    %1426 = vmatprep.subr.mxu0 %v1317
    %1427 = vmatpush2.msra.mxu0 %v1316
    %1428 = vmatprep.subr.mxu0 %v1315
    %1429 = vmatpush2.msra.mxu0 %v1314
    %1430 = vmatprep.subr.mxu0 %v1313
    %1431 = vmatpush2.msra.mxu0 %v1312
    %1432 = vmatprep.subr.mxu0 %v1311
    %1433 = vmatpush2.msra.mxu0 %v1310
    %1434 = vmatprep.subr.mxu0 %v1309
    %1435 = vmatpush2.msra.mxu0 %v1308
    %1436 = vmatprep.subr.mxu0 %v1307
    %1437 = vmatpush2.msra.mxu0 %v1306
    %1438 = vmatprep.subr.mxu0 %v1305
    %1439 = vmatpush2.msra.mxu0 %v1304
    %1440 = vmatprep.subr.mxu0 %v1303
    %1441 = vmatpush2.msra.mxu0 %v1302
    %1442 = vmatprep.subr.mxu0 %v1301
    %1443 = vmatpush2.msra.mxu0 %v1300
    %1444 = vmatprep.subr.mxu0 %v1299
    %1445 = vmatpush2.msra.mxu0 %v1298
    %1446 = vmatprep.subr.mxu0 %v1297
    %1447 = vmatpush2.msra.mxu0 %v1296
    %1448 = vmatprep.subr.mxu0 %v1295
    %1449 = vmatpush2.msra.mxu0 %v1294
    %1450 = vmatprep.subr.mxu0 %v1293
    %1451 = vmatpush2.msra.mxu0 %v1292
    %1452 = vmatprep.subr.mxu0 %v1291
    %1453 = vmatpush2.msra.mxu0 %v1290
    %1454 = vmatprep.subr.mxu0 %v1289
    %1455 = vmatpush2.msra.mxu0 %v1288
    %1456 = vmatprep.subr.mxu0 %v1287
    %1457 = vmatpush2.msra.mxu0 %v1286
    %1458 = vmatprep.mubr.f32.mxu0 %v1251
    %1459 = vmatmul.mubr.f32.gmra.mxu0 %v1250
    %v1460 = vpop.f32.mrf.mxu0
    %v1461 = vadd.f32 %v1387, %v1460
    %v1462 = vpop.f32.mrf.mxu0
    %v1463 = vadd.f32 %v1391, %v1462
    %1464 = vdwg.mxu0
    %1465 = vmatprep.subr.mxu0 %v1349
    %1466 = vmatpush1.msra.mxu0 %v1348
    %1467 = vmatprep.subr.mxu0 %v1347
    %1468 = vmatpush1.msra.mxu0 %v1346
    %1469 = vmatprep.subr.mxu0 %v1345
    %1470 = vmatpush1.msra.mxu0 %v1344
    %1471 = vmatprep.subr.mxu0 %v1343
    %1472 = vmatpush1.msra.mxu0 %v1342
    %1473 = vmatprep.subr.mxu0 %v1341
    %1474 = vmatpush1.msra.mxu0 %v1340
    %1475 = vmatprep.subr.mxu0 %v1339
    %1476 = vmatpush1.msra.mxu0 %v1338
    %1477 = vmatprep.subr.mxu0 %v1337
    %1478 = vmatpush1.msra.mxu0 %v1336
    %1479 = vmatprep.subr.mxu0 %v1335
    %1480 = vmatpush1.msra.mxu0 %v1334
    %1481 = vmatprep.subr.mxu0 %v1333
    %1482 = vmatpush1.msra.mxu0 %v1332
    %1483 = vmatprep.subr.mxu0 %v1331
    %1484 = vmatpush1.msra.mxu0 %v1330
    %1485 = vmatprep.subr.mxu0 %v1329
    %1486 = vmatpush1.msra.mxu0 %v1328
    %1487 = vmatprep.subr.mxu0 %v1327
    %1488 = vmatpush1.msra.mxu0 %v1326
    %1489 = vmatprep.subr.mxu0 %v1325
    %1490 = vmatpush1.msra.mxu0 %v1324
    %1491 = vmatprep.subr.mxu0 %v1323
    %1492 = vmatpush1.msra.mxu0 %v1322
    %1493 = vmatprep.subr.mxu0 %v1321
    %1494 = vmatpush1.msra.mxu0 %v1320
    %1495 = vmatprep.subr.mxu0 %v1319
    %1496 = vmatpush1.msra.mxu0 %v1318
    %1497 = vmatprep.subr.mxu0 %v1381
    %1498 = vmatpush2.msra.mxu0 %v1380
    %1499 = vmatprep.subr.mxu0 %v1379
    %1500 = vmatpush2.msra.mxu0 %v1378
    %1501 = vmatprep.subr.mxu0 %v1377
    %1502 = vmatpush2.msra.mxu0 %v1376
    %1503 = vmatprep.subr.mxu0 %v1375
    %1504 = vmatpush2.msra.mxu0 %v1374
    %1505 = vmatprep.subr.mxu0 %v1373
    %1506 = vmatpush2.msra.mxu0 %v1372
    %1507 = vmatprep.subr.mxu0 %v1371
    %1508 = vmatpush2.msra.mxu0 %v1370
    %1509 = vmatprep.subr.mxu0 %v1369
    %1510 = vmatpush2.msra.mxu0 %v1368
    %1511 = vmatprep.subr.mxu0 %v1367
    %1512 = vmatpush2.msra.mxu0 %v1366
    %1513 = vmatprep.subr.mxu0 %v1365
    %1514 = vmatpush2.msra.mxu0 %v1364
    %1515 = vmatprep.subr.mxu0 %v1363
    %1516 = vmatpush2.msra.mxu0 %v1362
    %1517 = vmatprep.subr.mxu0 %v1361
    %1518 = vmatpush2.msra.mxu0 %v1360
    %1519 = vmatprep.subr.mxu0 %v1359
    %1520 = vmatpush2.msra.mxu0 %v1358
    %1521 = vmatprep.subr.mxu0 %v1357
    %1522 = vmatpush2.msra.mxu0 %v1356
    %1523 = vmatprep.subr.mxu0 %v1355
    %1524 = vmatpush2.msra.mxu0 %v1354
    %1525 = vmatprep.subr.mxu0 %v1353
    %1526 = vmatpush2.msra.mxu0 %v1352
    %1527 = vmatprep.subr.mxu0 %v1351
    %1528 = vmatpush2.msra.mxu0 %v1350
    %1529 = vmatprep.mubr.f32.mxu0 %v1253
    %1530 = vmatmul.mubr.f32.gmra.mxu0 %v1252
    %v1531 = vpop.f32.mrf.mxu0
    %v1532 = vadd.f32 %v1461, %v1531
    %v1533 = vpop.f32.mrf.mxu0
    %v1534 = vadd.f32 %v1463, %v1533
    %1535 = vdwg.mxu0
    %v1536 = vmax.f32 %v1532, 0.0
    %v1537 = vmax.f32 %v1534, 0.0
    %v1538 = vld [vmem:[#allocation9] sm:$0xff]
    %v1539 = vld [vmem:[#allocation9 + $0x8] sm:$0xff]
    %v1540 = vld [vmem:[#allocation9 + $0x10] sm:$0xff]
    %v1541 = vld [vmem:[#allocation9 + $0x18] sm:$0xff]
    %v1542 = vld [vmem:[#allocation9 + $0x20] sm:$0xff]
    %v1543 = vld [vmem:[#allocation9 + $0x28] sm:$0xff]
    %v1544 = vld [vmem:[#allocation9 + $0x30] sm:$0xff]
    %v1545 = vld [vmem:[#allocation9 + $0x38] sm:$0xff]
    %v1546 = vld [vmem:[#allocation9 + $0x40] sm:$0xff]
    %v1547 = vld [vmem:[#allocation9 + $0x48] sm:$0xff]
    %v1548 = vld [vmem:[#allocation9 + $0x50] sm:$0xff]
    %v1549 = vld [vmem:[#allocation9 + $0x58] sm:$0xff]
    %v1550 = vld [vmem:[#allocation9 + $0x60] sm:$0xff]
    %v1551 = vld [vmem:[#allocation9 + $0x68] sm:$0xff]
    %v1552 = vld [vmem:[#allocation9 + $0x70] sm:$0xff]
    %v1553 = vld [vmem:[#allocation9 + $0x78] sm:$0xff]
    %v1554 = vld [vmem:[#allocation9 + $0x80] sm:$0xff]
    %v1555 = vld [vmem:[#allocation9 + $0x88] sm:$0xff]
    %v1556 = vld [vmem:[#allocation9 + $0x90] sm:$0xff]
    %v1557 = vld [vmem:[#allocation9 + $0x98] sm:$0xff]
    %v1558 = vld [vmem:[#allocation9 + $0xa0] sm:$0xff]
    %v1559 = vld [vmem:[#allocation9 + $0xa8] sm:$0xff]
    %v1560 = vld [vmem:[#allocation9 + $0xb0] sm:$0xff]
    %v1561 = vld [vmem:[#allocation9 + $0xb8] sm:$0xff]
    %v1562 = vld [vmem:[#allocation9 + $0xc0] sm:$0xff]
    %v1563 = vld [vmem:[#allocation9 + $0xc8] sm:$0xff]
    %v1564 = vld [vmem:[#allocation9 + $0xd0] sm:$0xff]
    %v1565 = vld [vmem:[#allocation9 + $0xd8] sm:$0xff]
    %v1566 = vld [vmem:[#allocation9 + $0xe0] sm:$0xff]
    %v1567 = vld [vmem:[#allocation9 + $0xe8] sm:$0xff]
    %v1568 = vld [vmem:[#allocation9 + $0xf0] sm:$0xff]
    %v1569 = vld [vmem:[#allocation9 + $0xf8] sm:$0xff]
    %v1570 = vld [vmem:[#allocation10] sm:$0x1]
    %v1572 = vlaneseq
    %v1573 = vshrl.u32 %v1572, 7
    %v1574 = vsub.s32 0, %v1573
    %v1575 = vrot.slane %v1570, %v1574
    %1577 = vmatprep.subr.mxu0 0.0
    %1578 = vmatpush1.msra.mxu0 %v1553
    %1579 = vmatprep.subr.mxu0 0.0
    %1580 = vmatpush1.msra.mxu0 %v1552
    %1581 = vmatprep.subr.mxu0 0.0
    %1582 = vmatpush1.msra.mxu0 %v1551
    %1583 = vmatprep.subr.mxu0 0.0
    %1584 = vmatpush1.msra.mxu0 %v1550
    %1585 = vmatprep.subr.mxu0 0.0
    %1586 = vmatpush1.msra.mxu0 %v1549
    %1587 = vmatprep.subr.mxu0 0.0
    %1588 = vmatpush1.msra.mxu0 %v1548
    %1589 = vmatprep.subr.mxu0 0.0
    %1590 = vmatpush1.msra.mxu0 %v1547
    %1591 = vmatprep.subr.mxu0 0.0
    %1592 = vmatpush1.msra.mxu0 %v1546
    %1593 = vmatprep.subr.mxu0 0.0
    %1594 = vmatpush1.msra.mxu0 %v1545
    %1595 = vmatprep.subr.mxu0 0.0
    %1596 = vmatpush1.msra.mxu0 %v1544
    %1597 = vmatprep.subr.mxu0 0.0
    %1598 = vmatpush1.msra.mxu0 %v1543
    %1599 = vmatprep.subr.mxu0 0.0
    %1600 = vmatpush1.msra.mxu0 %v1542
    %1601 = vmatprep.subr.mxu0 0.0
    %1602 = vmatpush1.msra.mxu0 %v1541
    %1603 = vmatprep.subr.mxu0 0.0
    %1604 = vmatpush1.msra.mxu0 %v1540
    %1605 = vmatprep.subr.mxu0 0.0
    %1606 = vmatpush1.msra.mxu0 %v1539
    %1607 = vmatprep.subr.mxu0 0.0
    %1608 = vmatpush1.msra.mxu0 %v1538
    %1609 = vmatprep.subr.mxu0 0.0
    %1610 = vmatpush2.msra.mxu0 %v1569
    %1611 = vmatprep.subr.mxu0 0.0
    %1612 = vmatpush2.msra.mxu0 %v1568
    %1613 = vmatprep.subr.mxu0 0.0
    %1614 = vmatpush2.msra.mxu0 %v1567
    %1615 = vmatprep.subr.mxu0 0.0
    %1616 = vmatpush2.msra.mxu0 %v1566
    %1617 = vmatprep.subr.mxu0 0.0
    %1618 = vmatpush2.msra.mxu0 %v1565
    %1619 = vmatprep.subr.mxu0 0.0
    %1620 = vmatpush2.msra.mxu0 %v1564
    %1621 = vmatprep.subr.mxu0 0.0
    %1622 = vmatpush2.msra.mxu0 %v1563
    %1623 = vmatprep.subr.mxu0 0.0
    %1624 = vmatpush2.msra.mxu0 %v1562
    %1625 = vmatprep.subr.mxu0 0.0
    %1626 = vmatpush2.msra.mxu0 %v1561
    %1627 = vmatprep.subr.mxu0 0.0
    %1628 = vmatpush2.msra.mxu0 %v1560
    %1629 = vmatprep.subr.mxu0 0.0
    %1630 = vmatpush2.msra.mxu0 %v1559
    %1631 = vmatprep.subr.mxu0 0.0
    %1632 = vmatpush2.msra.mxu0 %v1558
    %1633 = vmatprep.subr.mxu0 0.0
    %1634 = vmatpush2.msra.mxu0 %v1557
    %1635 = vmatprep.subr.mxu0 0.0
    %1636 = vmatpush2.msra.mxu0 %v1556
    %1637 = vmatprep.subr.mxu0 0.0
    %1638 = vmatpush2.msra.mxu0 %v1555
    %1639 = vmatprep.subr.mxu0 0.0
    %1640 = vmatpush2.msra.mxu0 %v1554
    %1641 = vmatprep.mubr.f32.mxu0 %v1537
    %1642 = vmatmul.mubr.f32.gmra.mxu0 %v1536
    %v1643 = vpop.f32.mrf.mxu0
    %v1644 = vadd.f32 %v1575, %v1643
    %v1645 = vpop.f32.mrf.mxu0
    %1646 = vdwg.mxu0
    %1647 = vst [vmem:[%s7] sm:$0x3] %v1644
    // Predicated region
    $region54: #{encode.1} parent=1 // pred_check
      _
    $region55: #{encode.1} parent=1 // pred_check_branch
      %1649 = sbr.rel (0) target = $region57
    $region56: #{encode.1} parent=1 // pred_region
      _
    $region57: #{encode.1} parent=1 // pred_fallthru
      _
    // Predicated region
    $region58: #{encode.1} parent=1 // pred_check
      _
    $region59: #{encode.1} parent=1 // pred_check_branch
      %1651 = sbr.rel (0) target = $region61
    $region60: #{encode.1} parent=1 // pred_region
      _
    $region61: #{encode.1} parent=1 // pred_fallthru
      _
    %1652 = vsyncpa [#allocation3], 1
    %1653 = vsyncpa [#allocation5], 1
    %1654 = vsyncpa [#allocation8], 1
    %1655 = vsyncpa [#allocation11], 1

</llo_original>
